<compile_context>
chip_gen: v6e
topology: v6e:2x2x1
jax: 0.10.0
libtpu: 0.0.40
codegen_flags: <defaults>
</compile_context>

<pallas_src>
import jax
import jax.numpy as jnp
from jax.experimental import pallas as pl
from jax.experimental.pallas import tpu as pltpu


def make_actor_kernel(D, H, A):
    """Builds the fused MLP kernel for static dims (D, H, A)."""
    eps = 1e-5
    inv_h = 1.0 / float(H)

    def kernel(x_ref, wslab_ref, wo_ref, pslab_ref, mut_ref):
        # p_slab rows: [0]=b0, [1..4]=bh, [5..9]=gamma, [10..14]=beta,
        #              [15]=bo (lane-padded to H)

        def ln_relu(h, idx):
            # One-pass LayerNorm (biased variance, like nn.LayerNorm; clamped
            # at 0).  NOTE: E[h^2]-mean^2 can lose precision for very large
            # pre-LN magnitudes; fine at this module's activation scale.
            s1 = jnp.sum(h, axis=-1, keepdims=True)
            s2 = jnp.sum(h * h, axis=-1, keepdims=True)
            mean = s1 * inv_h
            var = jnp.maximum(s2 * inv_h - mean * mean, 0.0)
            gamma = pslab_ref[5 + idx:6 + idx, :]    # (1, H)
            beta = pslab_ref[10 + idx:11 + idx, :]   # (1, H)
            scale = gamma * jax.lax.rsqrt(var + eps)  # fold gamma into norm factor
            return jnp.maximum((h - mean) * scale + beta, 0.0)

        # Layer 0: Linear(D -> H) + LN + ReLU.  astype is a no-op if the
        # caller already streams bf16 x (halves the dominant HBM read).
        x = x_ref[...].astype(jnp.bfloat16)
        h = jnp.dot(x, wslab_ref[0:D, :], preferred_element_type=jnp.float32)
        h = ln_relu(h + pslab_ref[0:1, :], 0)

        # 4 hidden blocks: Linear(H -> H) + LN + ReLU (statically unrolled).
        for k in range(4):
            w_k = wslab_ref[D + k * H: D + (k + 1) * H, :]
            h = jnp.dot(h.astype(jnp.bfloat16), w_k,
                        preferred_element_type=jnp.float32)
            h = ln_relu(h + pslab_ref[1 + k:2 + k, :], k + 1)

        # Output head: Linear(H -> A) + tanh.
        mu = jnp.dot(h.astype(jnp.bfloat16), wo_ref[...],
                     preferred_element_type=jnp.float32)     # (bb, A)
        mu = mu + pslab_ref[15:16, 0:A]
        # Lane-dense store: transpose (cheap XLU op) so the batch dim sits on
        # the 128 lanes; tanh runs on the dense (A, bb) layout.
        mut_ref[...] = jnp.tanh(mu.T)

    return kernel


def _round_up(v, m):
    return ((v + m - 1) // m) * m


def actor_forward(x, std, w0, b0, gamma, beta, wh, bh, wo, bo, *, block_b=1024):
    """Returns (mu, std) of the TruncatedNormal policy distribution.

    Weights use the y = x @ W + b convention: w0 (D,H), wh (4,H,H), wo (H,A).
    x may be f32 or bf16 (bf16 halves the streamed input DMA bytes).
    """
    B, D = x.shape
    H = w0.shape[1]
    A = wo.shape[1]

    # Pack parameters into three resident slabs (one-time XLA concat; cheap).
    w_slab = jnp.concatenate([w0, wh.reshape(4 * H, H)], axis=0).astype(jnp.bfloat16)
    wo_bf = wo.astype(jnp.bfloat16)
    bo_pad = jnp.pad(bo.reshape(1, A).astype(jnp.float32), ((0, 0), (0, H - A)))
    p_slab = jnp.concatenate(
        [b0.reshape(1, H), bh.reshape(4, H),
         gamma.reshape(5, H), beta.reshape(5, H), bo_pad],
        axis=0).astype(jnp.float32)                          # (16, H)

    # Batch tile: as large as possible (per-grid-step overhead dominates at
    # small tiles), a multiple of 128 so the transposed (A, bb) output block
    # is lane-aligned, and capped so the grid keeps >= 2 steps for v7x's two
    # TensorCores.  VMEM footprint at bb=1024 is well under 1 MiB.
    bb = min(_round_up(block_b, 128), _round_up(pl.cdiv(B, 2), 128))
    if bb >= B:
        bb = B  # small batch: one full-extent tile
    grid = (pl.cdiv(B, bb),)
    # NOTE: when B % bb != 0 the boundary tile computes on padded garbage
    # rows; outputs are masked so results stay correct.  Do not add any
    # reduction across the batch tile without handling this.

    def build_call(single_buffer_params):
        if single_buffer_params:
            # Constant-index parameter blocks never change across the grid;
            # single-buffering avoids a redundant second VMEM copy.
            param_kw = dict(pipeline_mode=pl.Buffered(1))
        else:
            param_kw = {}
        in_specs = [
            pl.BlockSpec((bb, D), lambda i: (i, 0)),                     # x (streamed)
            pl.BlockSpec((D + 4 * H, H), lambda i: (0, 0), **param_kw),  # hidden weights
            pl.BlockSpec((H, A), lambda i: (0, 0), **param_kw),          # output weight
            pl.BlockSpec((16, H), lambda i: (0, 0), **param_kw),         # bias / LN slab
        ]
        return pl.pallas_call(
            make_actor_kernel(D, H, A),
            out_shape=jax.ShapeDtypeStruct((A, B), jnp.float32),  # transposed, lane-dense
            grid=grid,
            in_specs=in_specs,
            out_specs=pl.BlockSpec((A, bb), lambda i: (0, i)),
            compiler_params=pltpu.CompilerParams(
                dimension_semantics=("parallel",)),                # shard tiles on v7x
        )

    try:
        mu_t = build_call(True)(x, w_slab, wo_bf, p_slab)
    except Exception:  # jax versions without BlockSpec pipeline_mode support
        mu_t = build_call(False)(x, w_slab, wo_bf, p_slab)

    mu = mu_t.T                                               # (B, A)
    std_out = jnp.full((B, A), std, dtype=jnp.float32)
    return mu, std_out


def _reference(x, std, w0, b0, gamma, beta, wh, bh, wo, bo):
    """Pure-JAX reference mirroring the kernel numerics (bf16 matmul operands)."""
    eps = 1e-5
    H = w0.shape[1]
    bf = jnp.bfloat16

    def ln_relu(h, i):
        s1 = jnp.sum(h, axis=-1, keepdims=True)
        s2 = jnp.sum(h * h, axis=-1, keepdims=True)
        mean = s1 / H
        var = jnp.maximum(s2 / H - mean * mean, 0.0)
        scale = gamma[i][None, :] * jax.lax.rsqrt(var + eps)
        return jnp.maximum((h - mean) * scale + beta[i][None, :], 0.0)

    h = jnp.dot(x.astype(bf), w0.astype(bf), preferred_element_type=jnp.float32) + b0
    h = ln_relu(h, 0)
    for k in range(4):
        h = jnp.dot(h.astype(bf), wh[k].astype(bf),
                    preferred_element_type=jnp.float32) + bh[k][None, :]
        h = ln_relu(h, k + 1)
    mu = jnp.tanh(jnp.dot(h.astype(bf), wo.astype(bf),
                          preferred_element_type=jnp.float32) + bo)
    return mu, jnp.full_like(mu, std)


if __name__ == "__main__":
    # Shapes consistent with the module:
    #   repr_multimodal_dim = 32, hidden_dim = 32, action_dim = 8
    D, H, A = 32, 32, 8
    std = 0.2

    key = jax.random.PRNGKey(0)
    k_x, k_w0, k_wh, k_wo, k_x2, k_x3 = jax.random.split(key, 6)

    scale = 0.1  # deterministic synthetic init (stand-in for utils.weight_init)
    w0 = jax.random.normal(k_w0, (D, H), jnp.float32) * scale
    b0 = jnp.zeros((1, H), jnp.float32)
    wh = jax.random.normal(k_wh, (4, H, H), jnp.float32) * scale
    bh = jnp.zeros((4, H), jnp.float32)
    gamma = jnp.ones((5, H), jnp.float32)
    beta = jnp.zeros((5, H), jnp.float32)
    wo = jax.random.normal(k_wo, (H, A), jnp.float32) * scale
    bo = jnp.zeros((1, A), jnp.float32)

    # Small batch: single full-extent tile.
    B = 8
    x = jax.random.normal(k_x, (B, D), jnp.float32)
    mu, std_out = actor_forward(x, std, w0, b0, gamma, beta, wh, bh, wo, bo)
    jax.block_until_ready((mu, std_out))
    mu_ref, std_ref = _reference(x, std, w0, b0, gamma, beta, wh, bh, wo, bo)
    assert mu.shape == (B, A) and std_out.shape == (B, A)
    assert jnp.allclose(mu, mu_ref, atol=1e-3), "mu mismatch vs reference (B=8)"
    assert jnp.allclose(std_out, std_ref, atol=1e-6), "std mismatch vs reference"

    # Batch large enough for a 2-step "parallel" grid (both v7x TensorCores).
    B2 = 256
    x2 = jax.random.normal(k_x2, (B2, D), jnp.float32)
    mu2, _ = actor_forward(x2, std, w0, b0, gamma, beta, wh, bh, wo, bo)
    jax.block_until_ready(mu2)
    mu2_ref, _ = _reference(x2, std, w0, b0, gamma, beta, wh, bh, wo, bo)
    assert jnp.allclose(mu2, mu2_ref, atol=1e-3), "mu mismatch vs reference (B=256)"

    # Non-multiple batch: boundary tile is padded on read / masked on store.
    B3 = 200
    x3 = jax.random.normal(k_x3, (B3, D), jnp.float32)
    mu3, _ = actor_forward(x3, std, w0, b0, gamma, beta, wh, bh, wo, bo, block_b=128)
    jax.block_until_ready(mu3)
    mu3_ref, _ = _reference(x3, std, w0, b0, gamma, beta, wh, bh, wo, bo)
    assert jnp.allclose(mu3, mu3_ref, atol=1e-3), "mu mismatch vs reference (B=200)"

    print("KERNEL_OK")
</pallas_src>

<mosaic_0001>
module attributes {stable_mosaic.version = 11 : i64} {
  func.func @kernel(%arg0: i32, %arg1: memref<8x32xf32, #tpu.memory_space<vmem>>, %arg2: memref<160x32xbf16, #tpu.memory_space<vmem>>, %arg3: memref<32x8xbf16, #tpu.memory_space<vmem>>, %arg4: memref<16x32xf32, #tpu.memory_space<vmem>>, %arg5: memref<8x8xf32, #tpu.memory_space<vmem>>) attributes {dimension_semantics = [#tpu.dimension_semantics<parallel>], iteration_bounds = array<i64: 1>, scalar_prefetch = 0 : i64, scratch_operands = 0 : i64, tpu.core_type = #tpu.core_type<tc>, window_params = [{transform_indices = @transform_0, window_bounds = array<i64: 8, 32>}, {pipeline_mode = #tpu.pipeline_mode<synchronous>, transform_indices = @transform_1, window_bounds = array<i64: 160, 32>}, {pipeline_mode = #tpu.pipeline_mode<synchronous>, transform_indices = @transform_2, window_bounds = array<i64: 32, 8>}, {pipeline_mode = #tpu.pipeline_mode<synchronous>, transform_indices = @transform_3, window_bounds = array<i64: 16, 32>}, {transform_indices = @transform_4, window_bounds = array<i64: 8, 8>}]} {
    %c0 = arith.constant 0 : index
    %c0_0 = arith.constant 0 : index
    %0 = vector.load %arg1[%c0, %c0_0] : memref<8x32xf32, #tpu.memory_space<vmem>>, vector<8x32xf32>
    %1 = arith.truncf %0 : vector<8x32xf32> to vector<8x32xbf16>
    %c0_1 = arith.constant 0 : index
    %c0_2 = arith.constant 0 : index
    %2 = vector.load %arg2[%c0_1, %c0_2] : memref<160x32xbf16, #tpu.memory_space<vmem>>, vector<32x32xbf16>
    %cst = arith.constant dense<0.000000e+00> : vector<8x32xf32>
    %3 = tpu.matmul %1, %2, %cst {dimension_numbers = #tpu.dot_dimension_numbers<[1], [0], [0], [1], [0, 0, 1, 1], [], []>} : vector<8x32xbf16>, vector<32x32xbf16>, vector<8x32xf32> -> vector<8x32xf32>
    %c0_3 = arith.constant 0 : index
    %c0_4 = arith.constant 0 : index
    %4 = vector.load %arg4[%c0_3, %c0_4] : memref<16x32xf32, #tpu.memory_space<vmem>>, vector<1x32xf32>
    %5 = vector.broadcast %4 : vector<1x32xf32> to vector<8x32xf32>
    %6 = arith.addf %3, %5 : vector<8x32xf32>
    %cst_5 = arith.constant dense<0.000000e+00> : vector<8xf32>
    %7 = vector.multi_reduction <add>, %6, %cst_5 [1] : vector<8x32xf32> to vector<8xf32>
    %8 = vector.shape_cast %7 : vector<8xf32> to vector<8x1xf32>
    %9 = arith.mulf %6, %6 : vector<8x32xf32>
    %cst_6 = arith.constant dense<0.000000e+00> : vector<8xf32>
    %10 = vector.multi_reduction <add>, %9, %cst_6 [1] : vector<8x32xf32> to vector<8xf32>
    %11 = vector.shape_cast %10 : vector<8xf32> to vector<8x1xf32>
    %cst_7 = arith.constant 3.125000e-02 : f32
    %12 = vector.broadcast %cst_7 : f32 to vector<8x1xf32>
    %13 = arith.mulf %8, %12 : vector<8x1xf32>
    %cst_8 = arith.constant 3.125000e-02 : f32
    %14 = vector.broadcast %cst_8 : f32 to vector<8x1xf32>
    %15 = arith.mulf %11, %14 : vector<8x1xf32>
    %16 = arith.mulf %13, %13 : vector<8x1xf32>
    %17 = arith.subf %15, %16 : vector<8x1xf32>
    %cst_9 = arith.constant 0.000000e+00 : f32
    %18 = vector.broadcast %cst_9 : f32 to vector<8x1xf32>
    %19 = arith.maximumf %17, %18 : vector<8x1xf32>
    %c5 = arith.constant 5 : index
    %c0_10 = arith.constant 0 : index
    %20 = vector.load %arg4[%c5, %c0_10] : memref<16x32xf32, #tpu.memory_space<vmem>>, vector<1x32xf32>
    %c10 = arith.constant 10 : index
    %c0_11 = arith.constant 0 : index
    %21 = vector.load %arg4[%c10, %c0_11] : memref<16x32xf32, #tpu.memory_space<vmem>>, vector<1x32xf32>
    %cst_12 = arith.constant 9.99999974E-6 : f32
    %22 = vector.broadcast %cst_12 : f32 to vector<8x1xf32>
    %23 = arith.addf %19, %22 : vector<8x1xf32>
    %24 = math.rsqrt %23 : vector<8x1xf32>
    %25 = vector.broadcast %20 : vector<1x32xf32> to vector<8x32xf32>
    %26 = vector.broadcast %24 : vector<8x1xf32> to vector<8x32xf32>
    %27 = arith.mulf %25, %26 : vector<8x32xf32>
    %28 = vector.broadcast %13 : vector<8x1xf32> to vector<8x32xf32>
    %29 = arith.subf %6, %28 : vector<8x32xf32>
    %30 = arith.mulf %29, %27 : vector<8x32xf32>
    %31 = vector.broadcast %21 : vector<1x32xf32> to vector<8x32xf32>
    %32 = arith.addf %30, %31 : vector<8x32xf32>
    %cst_13 = arith.constant 0.000000e+00 : f32
    %33 = vector.broadcast %cst_13 : f32 to vector<8x32xf32>
    %34 = arith.maximumf %32, %33 : vector<8x32xf32>
    %c32 = arith.constant 32 : index
    %c0_14 = arith.constant 0 : index
    %35 = vector.load %arg2[%c32, %c0_14] : memref<160x32xbf16, #tpu.memory_space<vmem>>, vector<32x32xbf16>
    %36 = arith.truncf %34 : vector<8x32xf32> to vector<8x32xbf16>
    %cst_15 = arith.constant dense<0.000000e+00> : vector<8x32xf32>
    %37 = tpu.matmul %36, %35, %cst_15 {dimension_numbers = #tpu.dot_dimension_numbers<[1], [0], [0], [1], [0, 0, 1, 1], [], []>} : vector<8x32xbf16>, vector<32x32xbf16>, vector<8x32xf32> -> vector<8x32xf32>
    %c1 = arith.constant 1 : index
    %c0_16 = arith.constant 0 : index
    %38 = vector.load %arg4[%c1, %c0_16] : memref<16x32xf32, #tpu.memory_space<vmem>>, vector<1x32xf32>
    %39 = vector.broadcast %38 : vector<1x32xf32> to vector<8x32xf32>
    %40 = arith.addf %37, %39 : vector<8x32xf32>
    %cst_17 = arith.constant dense<0.000000e+00> : vector<8xf32>
    %41 = vector.multi_reduction <add>, %40, %cst_17 [1] : vector<8x32xf32> to vector<8xf32>
    %42 = vector.shape_cast %41 : vector<8xf32> to vector<8x1xf32>
    %43 = arith.mulf %40, %40 : vector<8x32xf32>
    %cst_18 = arith.constant dense<0.000000e+00> : vector<8xf32>
    %44 = vector.multi_reduction <add>, %43, %cst_18 [1] : vector<8x32xf32> to vector<8xf32>
    %45 = vector.shape_cast %44 : vector<8xf32> to vector<8x1xf32>
    %cst_19 = arith.constant 3.125000e-02 : f32
    %46 = vector.broadcast %cst_19 : f32 to vector<8x1xf32>
    %47 = arith.mulf %42, %46 : vector<8x1xf32>
    %cst_20 = arith.constant 3.125000e-02 : f32
    %48 = vector.broadcast %cst_20 : f32 to vector<8x1xf32>
    %49 = arith.mulf %45, %48 : vector<8x1xf32>
    %50 = arith.mulf %47, %47 : vector<8x1xf32>
    %51 = arith.subf %49, %50 : vector<8x1xf32>
    %cst_21 = arith.constant 0.000000e+00 : f32
    %52 = vector.broadcast %cst_21 : f32 to vector<8x1xf32>
    %53 = arith.maximumf %51, %52 : vector<8x1xf32>
    %c6 = arith.constant 6 : index
    %c0_22 = arith.constant 0 : index
    %54 = vector.load %arg4[%c6, %c0_22] : memref<16x32xf32, #tpu.memory_space<vmem>>, vector<1x32xf32>
    %c11 = arith.constant 11 : index
    %c0_23 = arith.constant 0 : index
    %55 = vector.load %arg4[%c11, %c0_23] : memref<16x32xf32, #tpu.memory_space<vmem>>, vector<1x32xf32>
    %cst_24 = arith.constant 9.99999974E-6 : f32
    %56 = vector.broadcast %cst_24 : f32 to vector<8x1xf32>
    %57 = arith.addf %53, %56 : vector<8x1xf32>
    %58 = math.rsqrt %57 : vector<8x1xf32>
    %59 = vector.broadcast %54 : vector<1x32xf32> to vector<8x32xf32>
    %60 = vector.broadcast %58 : vector<8x1xf32> to vector<8x32xf32>
    %61 = arith.mulf %59, %60 : vector<8x32xf32>
    %62 = vector.broadcast %47 : vector<8x1xf32> to vector<8x32xf32>
    %63 = arith.subf %40, %62 : vector<8x32xf32>
    %64 = arith.mulf %63, %61 : vector<8x32xf32>
    %65 = vector.broadcast %55 : vector<1x32xf32> to vector<8x32xf32>
    %66 = arith.addf %64, %65 : vector<8x32xf32>
    %cst_25 = arith.constant 0.000000e+00 : f32
    %67 = vector.broadcast %cst_25 : f32 to vector<8x32xf32>
    %68 = arith.maximumf %66, %67 : vector<8x32xf32>
    %c64 = arith.constant 64 : index
    %c0_26 = arith.constant 0 : index
    %69 = vector.load %arg2[%c64, %c0_26] : memref<160x32xbf16, #tpu.memory_space<vmem>>, vector<32x32xbf16>
    %70 = arith.truncf %68 : vector<8x32xf32> to vector<8x32xbf16>
    %cst_27 = arith.constant dense<0.000000e+00> : vector<8x32xf32>
    %71 = tpu.matmul %70, %69, %cst_27 {dimension_numbers = #tpu.dot_dimension_numbers<[1], [0], [0], [1], [0, 0, 1, 1], [], []>} : vector<8x32xbf16>, vector<32x32xbf16>, vector<8x32xf32> -> vector<8x32xf32>
    %c2 = arith.constant 2 : index
    %c0_28 = arith.constant 0 : index
    %72 = vector.load %arg4[%c2, %c0_28] : memref<16x32xf32, #tpu.memory_space<vmem>>, vector<1x32xf32>
    %73 = vector.broadcast %72 : vector<1x32xf32> to vector<8x32xf32>
    %74 = arith.addf %71, %73 : vector<8x32xf32>
    %cst_29 = arith.constant dense<0.000000e+00> : vector<8xf32>
    %75 = vector.multi_reduction <add>, %74, %cst_29 [1] : vector<8x32xf32> to vector<8xf32>
    %76 = vector.shape_cast %75 : vector<8xf32> to vector<8x1xf32>
    %77 = arith.mulf %74, %74 : vector<8x32xf32>
    %cst_30 = arith.constant dense<0.000000e+00> : vector<8xf32>
    %78 = vector.multi_reduction <add>, %77, %cst_30 [1] : vector<8x32xf32> to vector<8xf32>
    %79 = vector.shape_cast %78 : vector<8xf32> to vector<8x1xf32>
    %cst_31 = arith.constant 3.125000e-02 : f32
    %80 = vector.broadcast %cst_31 : f32 to vector<8x1xf32>
    %81 = arith.mulf %76, %80 : vector<8x1xf32>
    %cst_32 = arith.constant 3.125000e-02 : f32
    %82 = vector.broadcast %cst_32 : f32 to vector<8x1xf32>
    %83 = arith.mulf %79, %82 : vector<8x1xf32>
    %84 = arith.mulf %81, %81 : vector<8x1xf32>
    %85 = arith.subf %83, %84 : vector<8x1xf32>
    %cst_33 = arith.constant 0.000000e+00 : f32
    %86 = vector.broadcast %cst_33 : f32 to vector<8x1xf32>
    %87 = arith.maximumf %85, %86 : vector<8x1xf32>
    %c7 = arith.constant 7 : index
    %c0_34 = arith.constant 0 : index
    %88 = vector.load %arg4[%c7, %c0_34] : memref<16x32xf32, #tpu.memory_space<vmem>>, vector<1x32xf32>
    %c12 = arith.constant 12 : index
    %c0_35 = arith.constant 0 : index
    %89 = vector.load %arg4[%c12, %c0_35] : memref<16x32xf32, #tpu.memory_space<vmem>>, vector<1x32xf32>
    %cst_36 = arith.constant 9.99999974E-6 : f32
    %90 = vector.broadcast %cst_36 : f32 to vector<8x1xf32>
    %91 = arith.addf %87, %90 : vector<8x1xf32>
    %92 = math.rsqrt %91 : vector<8x1xf32>
    %93 = vector.broadcast %88 : vector<1x32xf32> to vector<8x32xf32>
    %94 = vector.broadcast %92 : vector<8x1xf32> to vector<8x32xf32>
    %95 = arith.mulf %93, %94 : vector<8x32xf32>
    %96 = vector.broadcast %81 : vector<8x1xf32> to vector<8x32xf32>
    %97 = arith.subf %74, %96 : vector<8x32xf32>
    %98 = arith.mulf %97, %95 : vector<8x32xf32>
    %99 = vector.broadcast %89 : vector<1x32xf32> to vector<8x32xf32>
    %100 = arith.addf %98, %99 : vector<8x32xf32>
    %cst_37 = arith.constant 0.000000e+00 : f32
    %101 = vector.broadcast %cst_37 : f32 to vector<8x32xf32>
    %102 = arith.maximumf %100, %101 : vector<8x32xf32>
    %c96 = arith.constant 96 : index
    %c0_38 = arith.constant 0 : index
    %103 = vector.load %arg2[%c96, %c0_38] : memref<160x32xbf16, #tpu.memory_space<vmem>>, vector<32x32xbf16>
    %104 = arith.truncf %102 : vector<8x32xf32> to vector<8x32xbf16>
    %cst_39 = arith.constant dense<0.000000e+00> : vector<8x32xf32>
    %105 = tpu.matmul %104, %103, %cst_39 {dimension_numbers = #tpu.dot_dimension_numbers<[1], [0], [0], [1], [0, 0, 1, 1], [], []>} : vector<8x32xbf16>, vector<32x32xbf16>, vector<8x32xf32> -> vector<8x32xf32>
    %c3 = arith.constant 3 : index
    %c0_40 = arith.constant 0 : index
    %106 = vector.load %arg4[%c3, %c0_40] : memref<16x32xf32, #tpu.memory_space<vmem>>, vector<1x32xf32>
    %107 = vector.broadcast %106 : vector<1x32xf32> to vector<8x32xf32>
    %108 = arith.addf %105, %107 : vector<8x32xf32>
    %cst_41 = arith.constant dense<0.000000e+00> : vector<8xf32>
    %109 = vector.multi_reduction <add>, %108, %cst_41 [1] : vector<8x32xf32> to vector<8xf32>
    %110 = vector.shape_cast %109 : vector<8xf32> to vector<8x1xf32>
    %111 = arith.mulf %108, %108 : vector<8x32xf32>
    %cst_42 = arith.constant dense<0.000000e+00> : vector<8xf32>
    %112 = vector.multi_reduction <add>, %111, %cst_42 [1] : vector<8x32xf32> to vector<8xf32>
    %113 = vector.shape_cast %112 : vector<8xf32> to vector<8x1xf32>
    %cst_43 = arith.constant 3.125000e-02 : f32
    %114 = vector.broadcast %cst_43 : f32 to vector<8x1xf32>
    %115 = arith.mulf %110, %114 : vector<8x1xf32>
    %cst_44 = arith.constant 3.125000e-02 : f32
    %116 = vector.broadcast %cst_44 : f32 to vector<8x1xf32>
    %117 = arith.mulf %113, %116 : vector<8x1xf32>
    %118 = arith.mulf %115, %115 : vector<8x1xf32>
    %119 = arith.subf %117, %118 : vector<8x1xf32>
    %cst_45 = arith.constant 0.000000e+00 : f32
    %120 = vector.broadcast %cst_45 : f32 to vector<8x1xf32>
    %121 = arith.maximumf %119, %120 : vector<8x1xf32>
    %c8 = arith.constant 8 : index
    %c0_46 = arith.constant 0 : index
    %122 = vector.load %arg4[%c8, %c0_46] : memref<16x32xf32, #tpu.memory_space<vmem>>, vector<1x32xf32>
    %c13 = arith.constant 13 : index
    %c0_47 = arith.constant 0 : index
    %123 = vector.load %arg4[%c13, %c0_47] : memref<16x32xf32, #tpu.memory_space<vmem>>, vector<1x32xf32>
    %cst_48 = arith.constant 9.99999974E-6 : f32
    %124 = vector.broadcast %cst_48 : f32 to vector<8x1xf32>
    %125 = arith.addf %121, %124 : vector<8x1xf32>
    %126 = math.rsqrt %125 : vector<8x1xf32>
    %127 = vector.broadcast %122 : vector<1x32xf32> to vector<8x32xf32>
    %128 = vector.broadcast %126 : vector<8x1xf32> to vector<8x32xf32>
    %129 = arith.mulf %127, %128 : vector<8x32xf32>
    %130 = vector.broadcast %115 : vector<8x1xf32> to vector<8x32xf32>
    %131 = arith.subf %108, %130 : vector<8x32xf32>
    %132 = arith.mulf %131, %129 : vector<8x32xf32>
    %133 = vector.broadcast %123 : vector<1x32xf32> to vector<8x32xf32>
    %134 = arith.addf %132, %133 : vector<8x32xf32>
    %cst_49 = arith.constant 0.000000e+00 : f32
    %135 = vector.broadcast %cst_49 : f32 to vector<8x32xf32>
    %136 = arith.maximumf %134, %135 : vector<8x32xf32>
    %c128 = arith.constant 128 : index
    %c0_50 = arith.constant 0 : index
    %137 = vector.load %arg2[%c128, %c0_50] : memref<160x32xbf16, #tpu.memory_space<vmem>>, vector<32x32xbf16>
    %138 = arith.truncf %136 : vector<8x32xf32> to vector<8x32xbf16>
    %cst_51 = arith.constant dense<0.000000e+00> : vector<8x32xf32>
    %139 = tpu.matmul %138, %137, %cst_51 {dimension_numbers = #tpu.dot_dimension_numbers<[1], [0], [0], [1], [0, 0, 1, 1], [], []>} : vector<8x32xbf16>, vector<32x32xbf16>, vector<8x32xf32> -> vector<8x32xf32>
    %c4 = arith.constant 4 : index
    %c0_52 = arith.constant 0 : index
    %140 = vector.load %arg4[%c4, %c0_52] : memref<16x32xf32, #tpu.memory_space<vmem>>, vector<1x32xf32>
    %141 = vector.broadcast %140 : vector<1x32xf32> to vector<8x32xf32>
    %142 = arith.addf %139, %141 : vector<8x32xf32>
    %cst_53 = arith.constant dense<0.000000e+00> : vector<8xf32>
    %143 = vector.multi_reduction <add>, %142, %cst_53 [1] : vector<8x32xf32> to vector<8xf32>
    %144 = vector.shape_cast %143 : vector<8xf32> to vector<8x1xf32>
    %145 = arith.mulf %142, %142 : vector<8x32xf32>
    %cst_54 = arith.constant dense<0.000000e+00> : vector<8xf32>
    %146 = vector.multi_reduction <add>, %145, %cst_54 [1] : vector<8x32xf32> to vector<8xf32>
    %147 = vector.shape_cast %146 : vector<8xf32> to vector<8x1xf32>
    %cst_55 = arith.constant 3.125000e-02 : f32
    %148 = vector.broadcast %cst_55 : f32 to vector<8x1xf32>
    %149 = arith.mulf %144, %148 : vector<8x1xf32>
    %cst_56 = arith.constant 3.125000e-02 : f32
    %150 = vector.broadcast %cst_56 : f32 to vector<8x1xf32>
    %151 = arith.mulf %147, %150 : vector<8x1xf32>
    %152 = arith.mulf %149, %149 : vector<8x1xf32>
    %153 = arith.subf %151, %152 : vector<8x1xf32>
    %cst_57 = arith.constant 0.000000e+00 : f32
    %154 = vector.broadcast %cst_57 : f32 to vector<8x1xf32>
    %155 = arith.maximumf %153, %154 : vector<8x1xf32>
    %c9 = arith.constant 9 : index
    %c0_58 = arith.constant 0 : index
    %156 = vector.load %arg4[%c9, %c0_58] : memref<16x32xf32, #tpu.memory_space<vmem>>, vector<1x32xf32>
    %c14 = arith.constant 14 : index
    %c0_59 = arith.constant 0 : index
    %157 = vector.load %arg4[%c14, %c0_59] : memref<16x32xf32, #tpu.memory_space<vmem>>, vector<1x32xf32>
    %cst_60 = arith.constant 9.99999974E-6 : f32
    %158 = vector.broadcast %cst_60 : f32 to vector<8x1xf32>
    %159 = arith.addf %155, %158 : vector<8x1xf32>
    %160 = math.rsqrt %159 : vector<8x1xf32>
    %161 = vector.broadcast %156 : vector<1x32xf32> to vector<8x32xf32>
    %162 = vector.broadcast %160 : vector<8x1xf32> to vector<8x32xf32>
    %163 = arith.mulf %161, %162 : vector<8x32xf32>
    %164 = vector.broadcast %149 : vector<8x1xf32> to vector<8x32xf32>
    %165 = arith.subf %142, %164 : vector<8x32xf32>
    %166 = arith.mulf %165, %163 : vector<8x32xf32>
    %167 = vector.broadcast %157 : vector<1x32xf32> to vector<8x32xf32>
    %168 = arith.addf %166, %167 : vector<8x32xf32>
    %cst_61 = arith.constant 0.000000e+00 : f32
    %169 = vector.broadcast %cst_61 : f32 to vector<8x32xf32>
    %170 = arith.maximumf %168, %169 : vector<8x32xf32>
    %171 = arith.truncf %170 : vector<8x32xf32> to vector<8x32xbf16>
    %c0_62 = arith.constant 0 : index
    %c0_63 = arith.constant 0 : index
    %172 = vector.load %arg3[%c0_62, %c0_63] : memref<32x8xbf16, #tpu.memory_space<vmem>>, vector<32x8xbf16>
    %cst_64 = arith.constant dense<0.000000e+00> : vector<8x8xf32>
    %173 = tpu.matmul %171, %172, %cst_64 {dimension_numbers = #tpu.dot_dimension_numbers<[1], [0], [0], [1], [0, 0, 1, 1], [], []>} : vector<8x32xbf16>, vector<32x8xbf16>, vector<8x8xf32> -> vector<8x8xf32>
    %c15 = arith.constant 15 : index
    %c0_65 = arith.constant 0 : index
    %174 = vector.load %arg4[%c15, %c0_65] : memref<16x32xf32, #tpu.memory_space<vmem>>, vector<1x8xf32>
    %175 = vector.broadcast %174 : vector<1x8xf32> to vector<8x8xf32>
    %176 = arith.addf %173, %175 : vector<8x8xf32>
    %177 = tpu.transpose %176, [1, 0] : vector<8x8xf32> -> vector<8x8xf32>
    %178 = math.tanh %177 : vector<8x8xf32>
    %c0_66 = arith.constant 0 : index
    %c0_67 = arith.constant 0 : index
    %179 = vector.load %arg5[%c0_66, %c0_67] : memref<8x8xf32, #tpu.memory_space<vmem>>, vector<8x8xf32>
    tpu.vector_store %arg5[%c0_66, %c0_67], %178 {strides = array<i32>} : memref<8x8xf32, #tpu.memory_space<vmem>>, vector<8x8xf32>,
    return
  }
  func.func @transform_0(%arg0: i32) -> (i32, i32) {
    %c0_i32 = arith.constant 0 : i32
    %c0_i32_0 = arith.constant 0 : i32
    return %arg0, %c0_i32 : i32, i32
  }
  func.func @transform_1(%arg0: i32) -> (i32, i32) {
    %c0_i32 = arith.constant 0 : i32
    %c0_i32_0 = arith.constant 0 : i32
    %c0_i32_1 = arith.constant 0 : i32
    return %c0_i32, %c0_i32_0 : i32, i32
  }
  func.func @transform_2(%arg0: i32) -> (i32, i32) {
    %c0_i32 = arith.constant 0 : i32
    %c0_i32_0 = arith.constant 0 : i32
    %c0_i32_1 = arith.constant 0 : i32
    return %c0_i32, %c0_i32_0 : i32, i32
  }
  func.func @transform_3(%arg0: i32) -> (i32, i32) {
    %c0_i32 = arith.constant 0 : i32
    %c0_i32_0 = arith.constant 0 : i32
    %c0_i32_1 = arith.constant 0 : i32
    return %c0_i32, %c0_i32_0 : i32, i32
  }
  func.func @transform_4(%arg0: i32) -> (i32, i32) {
    %c0_i32 = arith.constant 0 : i32
    %c0_i32_0 = arith.constant 0 : i32
    return %c0_i32, %arg0 : i32, i32
  }
}

module attributes {stable_mosaic.version = 11 : i64} {
  func.func @kernel(%arg0: i32, %arg1: memref<8x32xf32, #tpu.memory_space<vmem>>, %arg2: memref<160x32xbf16, #tpu.memory_space<vmem>>, %arg3: memref<32x8xbf16, #tpu.memory_space<vmem>>, %arg4: memref<16x32xf32, #tpu.memory_space<vmem>>, %arg5: memref<8x8xf32, #tpu.memory_space<vmem>>) attributes {dimension_semantics = [#tpu.dimension_semantics<parallel>], iteration_bounds = array<i64: 1>, scalar_prefetch = 0 : i64, scratch_operands = 0 : i64, tpu.core_type = #tpu.core_type<tc>, window_params = [{transform_indices = @transform_0, window_bounds = array<i64: 8, 32>}, {pipeline_mode = #tpu.pipeline_mode<synchronous>, transform_indices = @transform_1, window_bounds = array<i64: 160, 32>}, {pipeline_mode = #tpu.pipeline_mode<synchronous>, transform_indices = @transform_2, window_bounds = array<i64: 32, 8>}, {pipeline_mode = #tpu.pipeline_mode<synchronous>, transform_indices = @transform_3, window_bounds = array<i64: 16, 32>}, {transform_indices = @transform_4, window_bounds = array<i64: 8, 8>}]} {
    %c0 = arith.constant 0 : index
    %c0_0 = arith.constant 0 : index
    %0 = vector.load %arg1[%c0, %c0_0] : memref<8x32xf32, #tpu.memory_space<vmem>>, vector<8x32xf32>
    %1 = arith.truncf %0 : vector<8x32xf32> to vector<8x32xbf16>
    %c0_1 = arith.constant 0 : index
    %c0_2 = arith.constant 0 : index
    %2 = vector.load %arg2[%c0_1, %c0_2] : memref<160x32xbf16, #tpu.memory_space<vmem>>, vector<32x32xbf16>
    %cst = arith.constant dense<0.000000e+00> : vector<8x32xf32>
    %3 = tpu.matmul %1, %2, %cst {dimension_numbers = #tpu.dot_dimension_numbers<[1], [0], [0], [1], [0, 0, 1, 1], [], []>} : vector<8x32xbf16>, vector<32x32xbf16>, vector<8x32xf32> -> vector<8x32xf32>
    %c0_3 = arith.constant 0 : index
    %c0_4 = arith.constant 0 : index
    %4 = vector.load %arg4[%c0_3, %c0_4] : memref<16x32xf32, #tpu.memory_space<vmem>>, vector<1x32xf32>
    %5 = vector.broadcast %4 : vector<1x32xf32> to vector<8x32xf32>
    %6 = arith.addf %3, %5 : vector<8x32xf32>
    %cst_5 = arith.constant dense<0.000000e+00> : vector<8xf32>
    %7 = vector.multi_reduction <add>, %6, %cst_5 [1] : vector<8x32xf32> to vector<8xf32>
    %8 = vector.shape_cast %7 : vector<8xf32> to vector<8x1xf32>
    %9 = arith.mulf %6, %6 : vector<8x32xf32>
    %cst_6 = arith.constant dense<0.000000e+00> : vector<8xf32>
    %10 = vector.multi_reduction <add>, %9, %cst_6 [1] : vector<8x32xf32> to vector<8xf32>
    %11 = vector.shape_cast %10 : vector<8xf32> to vector<8x1xf32>
    %cst_7 = arith.constant 3.125000e-02 : f32
    %12 = vector.broadcast %cst_7 : f32 to vector<8x1xf32>
    %13 = arith.mulf %8, %12 : vector<8x1xf32>
    %cst_8 = arith.constant 3.125000e-02 : f32
    %14 = vector.broadcast %cst_8 : f32 to vector<8x1xf32>
    %15 = arith.mulf %11, %14 : vector<8x1xf32>
    %16 = arith.mulf %13, %13 : vector<8x1xf32>
    %17 = arith.subf %15, %16 : vector<8x1xf32>
    %cst_9 = arith.constant 0.000000e+00 : f32
    %18 = vector.broadcast %cst_9 : f32 to vector<8x1xf32>
    %19 = arith.maximumf %17, %18 : vector<8x1xf32>
    %c5 = arith.constant 5 : index
    %c0_10 = arith.constant 0 : index
    %20 = vector.load %arg4[%c5, %c0_10] : memref<16x32xf32, #tpu.memory_space<vmem>>, vector<1x32xf32>
    %c10 = arith.constant 10 : index
    %c0_11 = arith.constant 0 : index
    %21 = vector.load %arg4[%c10, %c0_11] : memref<16x32xf32, #tpu.memory_space<vmem>>, vector<1x32xf32>
    %cst_12 = arith.constant 9.99999974E-6 : f32
    %22 = vector.broadcast %cst_12 : f32 to vector<8x1xf32>
    %23 = arith.addf %19, %22 : vector<8x1xf32>
    %24 = math.rsqrt %23 : vector<8x1xf32>
    %25 = vector.broadcast %20 : vector<1x32xf32> to vector<8x32xf32>
    %26 = vector.broadcast %24 : vector<8x1xf32> to vector<8x32xf32>
    %27 = arith.mulf %25, %26 : vector<8x32xf32>
    %28 = vector.broadcast %13 : vector<8x1xf32> to vector<8x32xf32>
    %29 = arith.subf %6, %28 : vector<8x32xf32>
    %30 = arith.mulf %29, %27 : vector<8x32xf32>
    %31 = vector.broadcast %21 : vector<1x32xf32> to vector<8x32xf32>
    %32 = arith.addf %30, %31 : vector<8x32xf32>
    %cst_13 = arith.constant 0.000000e+00 : f32
    %33 = vector.broadcast %cst_13 : f32 to vector<8x32xf32>
    %34 = arith.maximumf %32, %33 : vector<8x32xf32>
    %c32 = arith.constant 32 : index
    %c0_14 = arith.constant 0 : index
    %35 = vector.load %arg2[%c32, %c0_14] : memref<160x32xbf16, #tpu.memory_space<vmem>>, vector<32x32xbf16>
    %36 = arith.truncf %34 : vector<8x32xf32> to vector<8x32xbf16>
    %cst_15 = arith.constant dense<0.000000e+00> : vector<8x32xf32>
    %37 = tpu.matmul %36, %35, %cst_15 {dimension_numbers = #tpu.dot_dimension_numbers<[1], [0], [0], [1], [0, 0, 1, 1], [], []>} : vector<8x32xbf16>, vector<32x32xbf16>, vector<8x32xf32> -> vector<8x32xf32>
    %c1 = arith.constant 1 : index
    %c0_16 = arith.constant 0 : index
    %38 = vector.load %arg4[%c1, %c0_16] : memref<16x32xf32, #tpu.memory_space<vmem>>, vector<1x32xf32>
    %39 = vector.broadcast %38 : vector<1x32xf32> to vector<8x32xf32>
    %40 = arith.addf %37, %39 : vector<8x32xf32>
    %cst_17 = arith.constant dense<0.000000e+00> : vector<8xf32>
    %41 = vector.multi_reduction <add>, %40, %cst_17 [1] : vector<8x32xf32> to vector<8xf32>
    %42 = vector.shape_cast %41 : vector<8xf32> to vector<8x1xf32>
    %43 = arith.mulf %40, %40 : vector<8x32xf32>
    %cst_18 = arith.constant dense<0.000000e+00> : vector<8xf32>
    %44 = vector.multi_reduction <add>, %43, %cst_18 [1] : vector<8x32xf32> to vector<8xf32>
    %45 = vector.shape_cast %44 : vector<8xf32> to vector<8x1xf32>
    %cst_19 = arith.constant 3.125000e-02 : f32
    %46 = vector.broadcast %cst_19 : f32 to vector<8x1xf32>
    %47 = arith.mulf %42, %46 : vector<8x1xf32>
    %cst_20 = arith.constant 3.125000e-02 : f32
    %48 = vector.broadcast %cst_20 : f32 to vector<8x1xf32>
    %49 = arith.mulf %45, %48 : vector<8x1xf32>
    %50 = arith.mulf %47, %47 : vector<8x1xf32>
    %51 = arith.subf %49, %50 : vector<8x1xf32>
    %cst_21 = arith.constant 0.000000e+00 : f32
    %52 = vector.broadcast %cst_21 : f32 to vector<8x1xf32>
    %53 = arith.maximumf %51, %52 : vector<8x1xf32>
    %c6 = arith.constant 6 : index
    %c0_22 = arith.constant 0 : index
    %54 = vector.load %arg4[%c6, %c0_22] : memref<16x32xf32, #tpu.memory_space<vmem>>, vector<1x32xf32>
    %c11 = arith.constant 11 : index
    %c0_23 = arith.constant 0 : index
    %55 = vector.load %arg4[%c11, %c0_23] : memref<16x32xf32, #tpu.memory_space<vmem>>, vector<1x32xf32>
    %cst_24 = arith.constant 9.99999974E-6 : f32
    %56 = vector.broadcast %cst_24 : f32 to vector<8x1xf32>
    %57 = arith.addf %53, %56 : vector<8x1xf32>
    %58 = math.rsqrt %57 : vector<8x1xf32>
    %59 = vector.broadcast %54 : vector<1x32xf32> to vector<8x32xf32>
    %60 = vector.broadcast %58 : vector<8x1xf32> to vector<8x32xf32>
    %61 = arith.mulf %59, %60 : vector<8x32xf32>
    %62 = vector.broadcast %47 : vector<8x1xf32> to vector<8x32xf32>
    %63 = arith.subf %40, %62 : vector<8x32xf32>
    %64 = arith.mulf %63, %61 : vector<8x32xf32>
    %65 = vector.broadcast %55 : vector<1x32xf32> to vector<8x32xf32>
    %66 = arith.addf %64, %65 : vector<8x32xf32>
    %cst_25 = arith.constant 0.000000e+00 : f32
    %67 = vector.broadcast %cst_25 : f32 to vector<8x32xf32>
    %68 = arith.maximumf %66, %67 : vector<8x32xf32>
    %c64 = arith.constant 64 : index
    %c0_26 = arith.constant 0 : index
    %69 = vector.load %arg2[%c64, %c0_26] : memref<160x32xbf16, #tpu.memory_space<vmem>>, vector<32x32xbf16>
    %70 = arith.truncf %68 : vector<8x32xf32> to vector<8x32xbf16>
    %cst_27 = arith.constant dense<0.000000e+00> : vector<8x32xf32>
    %71 = tpu.matmul %70, %69, %cst_27 {dimension_numbers = #tpu.dot_dimension_numbers<[1], [0], [0], [1], [0, 0, 1, 1], [], []>} : vector<8x32xbf16>, vector<32x32xbf16>, vector<8x32xf32> -> vector<8x32xf32>
    %c2 = arith.constant 2 : index
    %c0_28 = arith.constant 0 : index
    %72 = vector.load %arg4[%c2, %c0_28] : memref<16x32xf32, #tpu.memory_space<vmem>>, vector<1x32xf32>
    %73 = vector.broadcast %72 : vector<1x32xf32> to vector<8x32xf32>
    %74 = arith.addf %71, %73 : vector<8x32xf32>
    %cst_29 = arith.constant dense<0.000000e+00> : vector<8xf32>
    %75 = vector.multi_reduction <add>, %74, %cst_29 [1] : vector<8x32xf32> to vector<8xf32>
    %76 = vector.shape_cast %75 : vector<8xf32> to vector<8x1xf32>
    %77 = arith.mulf %74, %74 : vector<8x32xf32>
    %cst_30 = arith.constant dense<0.000000e+00> : vector<8xf32>
    %78 = vector.multi_reduction <add>, %77, %cst_30 [1] : vector<8x32xf32> to vector<8xf32>
    %79 = vector.shape_cast %78 : vector<8xf32> to vector<8x1xf32>
    %cst_31 = arith.constant 3.125000e-02 : f32
    %80 = vector.broadcast %cst_31 : f32 to vector<8x1xf32>
    %81 = arith.mulf %76, %80 : vector<8x1xf32>
    %cst_32 = arith.constant 3.125000e-02 : f32
    %82 = vector.broadcast %cst_32 : f32 to vector<8x1xf32>
    %83 = arith.mulf %79, %82 : vector<8x1xf32>
    %84 = arith.mulf %81, %81 : vector<8x1xf32>
    %85 = arith.subf %83, %84 : vector<8x1xf32>
    %cst_33 = arith.constant 0.000000e+00 : f32
    %86 = vector.broadcast %cst_33 : f32 to vector<8x1xf32>
    %87 = arith.maximumf %85, %86 : vector<8x1xf32>
    %c7 = arith.constant 7 : index
    %c0_34 = arith.constant 0 : index
    %88 = vector.load %arg4[%c7, %c0_34] : memref<16x32xf32, #tpu.memory_space<vmem>>, vector<1x32xf32>
    %c12 = arith.constant 12 : index
    %c0_35 = arith.constant 0 : index
    %89 = vector.load %arg4[%c12, %c0_35] : memref<16x32xf32, #tpu.memory_space<vmem>>, vector<1x32xf32>
    %cst_36 = arith.constant 9.99999974E-6 : f32
    %90 = vector.broadcast %cst_36 : f32 to vector<8x1xf32>
    %91 = arith.addf %87, %90 : vector<8x1xf32>
    %92 = math.rsqrt %91 : vector<8x1xf32>
    %93 = vector.broadcast %88 : vector<1x32xf32> to vector<8x32xf32>
    %94 = vector.broadcast %92 : vector<8x1xf32> to vector<8x32xf32>
    %95 = arith.mulf %93, %94 : vector<8x32xf32>
    %96 = vector.broadcast %81 : vector<8x1xf32> to vector<8x32xf32>
    %97 = arith.subf %74, %96 : vector<8x32xf32>
    %98 = arith.mulf %97, %95 : vector<8x32xf32>
    %99 = vector.broadcast %89 : vector<1x32xf32> to vector<8x32xf32>
    %100 = arith.addf %98, %99 : vector<8x32xf32>
    %cst_37 = arith.constant 0.000000e+00 : f32
    %101 = vector.broadcast %cst_37 : f32 to vector<8x32xf32>
    %102 = arith.maximumf %100, %101 : vector<8x32xf32>
    %c96 = arith.constant 96 : index
    %c0_38 = arith.constant 0 : index
    %103 = vector.load %arg2[%c96, %c0_38] : memref<160x32xbf16, #tpu.memory_space<vmem>>, vector<32x32xbf16>
    %104 = arith.truncf %102 : vector<8x32xf32> to vector<8x32xbf16>
    %cst_39 = arith.constant dense<0.000000e+00> : vector<8x32xf32>
    %105 = tpu.matmul %104, %103, %cst_39 {dimension_numbers = #tpu.dot_dimension_numbers<[1], [0], [0], [1], [0, 0, 1, 1], [], []>} : vector<8x32xbf16>, vector<32x32xbf16>, vector<8x32xf32> -> vector<8x32xf32>
    %c3 = arith.constant 3 : index
    %c0_40 = arith.constant 0 : index
    %106 = vector.load %arg4[%c3, %c0_40] : memref<16x32xf32, #tpu.memory_space<vmem>>, vector<1x32xf32>
    %107 = vector.broadcast %106 : vector<1x32xf32> to vector<8x32xf32>
    %108 = arith.addf %105, %107 : vector<8x32xf32>
    %cst_41 = arith.constant dense<0.000000e+00> : vector<8xf32>
    %109 = vector.multi_reduction <add>, %108, %cst_41 [1] : vector<8x32xf32> to vector<8xf32>
    %110 = vector.shape_cast %109 : vector<8xf32> to vector<8x1xf32>
    %111 = arith.mulf %108, %108 : vector<8x32xf32>
    %cst_42 = arith.constant dense<0.000000e+00> : vector<8xf32>
    %112 = vector.multi_reduction <add>, %111, %cst_42 [1] : vector<8x32xf32> to vector<8xf32>
    %113 = vector.shape_cast %112 : vector<8xf32> to vector<8x1xf32>
    %cst_43 = arith.constant 3.125000e-02 : f32
    %114 = vector.broadcast %cst_43 : f32 to vector<8x1xf32>
    %115 = arith.mulf %110, %114 : vector<8x1xf32>
    %cst_44 = arith.constant 3.125000e-02 : f32
    %116 = vector.broadcast %cst_44 : f32 to vector<8x1xf32>
    %117 = arith.mulf %113, %116 : vector<8x1xf32>
    %118 = arith.mulf %115, %115 : vector<8x1xf32>
    %119 = arith.subf %117, %118 : vector<8x1xf32>
    %cst_45 = arith.constant 0.000000e+00 : f32
    %120 = vector.broadcast %cst_45 : f32 to vector<8x1xf32>
    %121 = arith.maximumf %119, %120 : vector<8x1xf32>
    %c8 = arith.constant 8 : index
    %c0_46 = arith.constant 0 : index
    %122 = vector.load %arg4[%c8, %c0_46] : memref<16x32xf32, #tpu.memory_space<vmem>>, vector<1x32xf32>
    %c13 = arith.constant 13 : index
    %c0_47 = arith.constant 0 : index
    %123 = vector.load %arg4[%c13, %c0_47] : memref<16x32xf32, #tpu.memory_space<vmem>>, vector<1x32xf32>
    %cst_48 = arith.constant 9.99999974E-6 : f32
    %124 = vector.broadcast %cst_48 : f32 to vector<8x1xf32>
    %125 = arith.addf %121, %124 : vector<8x1xf32>
    %126 = math.rsqrt %125 : vector<8x1xf32>
    %127 = vector.broadcast %122 : vector<1x32xf32> to vector<8x32xf32>
    %128 = vector.broadcast %126 : vector<8x1xf32> to vector<8x32xf32>
    %129 = arith.mulf %127, %128 : vector<8x32xf32>
    %130 = vector.broadcast %115 : vector<8x1xf32> to vector<8x32xf32>
    %131 = arith.subf %108, %130 : vector<8x32xf32>
    %132 = arith.mulf %131, %129 : vector<8x32xf32>
    %133 = vector.broadcast %123 : vector<1x32xf32> to vector<8x32xf32>
    %134 = arith.addf %132, %133 : vector<8x32xf32>
    %cst_49 = arith.constant 0.000000e+00 : f32
    %135 = vector.broadcast %cst_49 : f32 to vector<8x32xf32>
    %136 = arith.maximumf %134, %135 : vector<8x32xf32>
    %c128 = arith.constant 128 : index
    %c0_50 = arith.constant 0 : index
    %137 = vector.load %arg2[%c128, %c0_50] : memref<160x32xbf16, #tpu.memory_space<vmem>>, vector<32x32xbf16>
    %138 = arith.truncf %136 : vector<8x32xf32> to vector<8x32xbf16>
    %cst_51 = arith.constant dense<0.000000e+00> : vector<8x32xf32>
    %139 = tpu.matmul %138, %137, %cst_51 {dimension_numbers = #tpu.dot_dimension_numbers<[1], [0], [0], [1], [0, 0, 1, 1], [], []>} : vector<8x32xbf16>, vector<32x32xbf16>, vector<8x32xf32> -> vector<8x32xf32>
    %c4 = arith.constant 4 : index
    %c0_52 = arith.constant 0 : index
    %140 = vector.load %arg4[%c4, %c0_52] : memref<16x32xf32, #tpu.memory_space<vmem>>, vector<1x32xf32>
    %141 = vector.broadcast %140 : vector<1x32xf32> to vector<8x32xf32>
    %142 = arith.addf %139, %141 : vector<8x32xf32>
    %cst_53 = arith.constant dense<0.000000e+00> : vector<8xf32>
    %143 = vector.multi_reduction <add>, %142, %cst_53 [1] : vector<8x32xf32> to vector<8xf32>
    %144 = vector.shape_cast %143 : vector<8xf32> to vector<8x1xf32>
    %145 = arith.mulf %142, %142 : vector<8x32xf32>
    %cst_54 = arith.constant dense<0.000000e+00> : vector<8xf32>
    %146 = vector.multi_reduction <add>, %145, %cst_54 [1] : vector<8x32xf32> to vector<8xf32>
    %147 = vector.shape_cast %146 : vector<8xf32> to vector<8x1xf32>
    %cst_55 = arith.constant 3.125000e-02 : f32
    %148 = vector.broadcast %cst_55 : f32 to vector<8x1xf32>
    %149 = arith.mulf %144, %148 : vector<8x1xf32>
    %cst_56 = arith.constant 3.125000e-02 : f32
    %150 = vector.broadcast %cst_56 : f32 to vector<8x1xf32>
    %151 = arith.mulf %147, %150 : vector<8x1xf32>
    %152 = arith.mulf %149, %149 : vector<8x1xf32>
    %153 = arith.subf %151, %152 : vector<8x1xf32>
    %cst_57 = arith.constant 0.000000e+00 : f32
    %154 = vector.broadcast %cst_57 : f32 to vector<8x1xf32>
    %155 = arith.maximumf %153, %154 : vector<8x1xf32>
    %c9 = arith.constant 9 : index
    %c0_58 = arith.constant 0 : index
    %156 = vector.load %arg4[%c9, %c0_58] : memref<16x32xf32, #tpu.memory_space<vmem>>, vector<1x32xf32>
    %c14 = arith.constant 14 : index
    %c0_59 = arith.constant 0 : index
    %157 = vector.load %arg4[%c14, %c0_59] : memref<16x32xf32, #tpu.memory_space<vmem>>, vector<1x32xf32>
    %cst_60 = arith.constant 9.99999974E-6 : f32
    %158 = vector.broadcast %cst_60 : f32 to vector<8x1xf32>
    %159 = arith.addf %155, %158 : vector<8x1xf32>
    %160 = math.rsqrt %159 : vector<8x1xf32>
    %161 = vector.broadcast %156 : vector<1x32xf32> to vector<8x32xf32>
    %162 = vector.broadcast %160 : vector<8x1xf32> to vector<8x32xf32>
    %163 = arith.mulf %161, %162 : vector<8x32xf32>
    %164 = vector.broadcast %149 : vector<8x1xf32> to vector<8x32xf32>
    %165 = arith.subf %142, %164 : vector<8x32xf32>
    %166 = arith.mulf %165, %163 : vector<8x32xf32>
    %167 = vector.broadcast %157 : vector<1x32xf32> to vector<8x32xf32>
    %168 = arith.addf %166, %167 : vector<8x32xf32>
    %cst_61 = arith.constant 0.000000e+00 : f32
    %169 = vector.broadcast %cst_61 : f32 to vector<8x32xf32>
    %170 = arith.maximumf %168, %169 : vector<8x32xf32>
    %171 = arith.truncf %170 : vector<8x32xf32> to vector<8x32xbf16>
    %c0_62 = arith.constant 0 : index
    %c0_63 = arith.constant 0 : index
    %172 = vector.load %arg3[%c0_62, %c0_63] : memref<32x8xbf16, #tpu.memory_space<vmem>>, vector<32x8xbf16>
    %cst_64 = arith.constant dense<0.000000e+00> : vector<8x8xf32>
    %173 = tpu.matmul %171, %172, %cst_64 {dimension_numbers = #tpu.dot_dimension_numbers<[1], [0], [0], [1], [0, 0, 1, 1], [], []>} : vector<8x32xbf16>, vector<32x8xbf16>, vector<8x8xf32> -> vector<8x8xf32>
    %c15 = arith.constant 15 : index
    %c0_65 = arith.constant 0 : index
    %174 = vector.load %arg4[%c15, %c0_65] : memref<16x32xf32, #tpu.memory_space<vmem>>, vector<1x8xf32>
    %175 = vector.broadcast %174 : vector<1x8xf32> to vector<8x8xf32>
    %176 = arith.addf %173, %175 : vector<8x8xf32>
    %177 = tpu.transpose %176, [1, 0] : vector<8x8xf32> -> vector<8x8xf32>
    %178 = math.tanh %177 : vector<8x8xf32>
    %c0_66 = arith.constant 0 : index
    %c0_67 = arith.constant 0 : index
    %179 = vector.load %arg5[%c0_66, %c0_67] : memref<8x8xf32, #tpu.memory_space<vmem>>, vector<8x8xf32>
    tpu.vector_store %arg5[%c0_66, %c0_67], %178 {strides = array<i32>} : memref<8x8xf32, #tpu.memory_space<vmem>>, vector<8x8xf32>,
    return
  }
  func.func @transform_0(%arg0: i32) -> (i32, i32) {
    %c0_i32 = arith.constant 0 : i32
    %c0_i32_0 = arith.constant 0 : i32
    return %arg0, %c0_i32 : i32, i32
  }
  func.func @transform_1(%arg0: i32) -> (i32, i32) {
    %c0_i32 = arith.constant 0 : i32
    %c0_i32_0 = arith.constant 0 : i32
    %c0_i32_1 = arith.constant 0 : i32
    return %c0_i32, %c0_i32_0 : i32, i32
  }
  func.func @transform_2(%arg0: i32) -> (i32, i32) {
    %c0_i32 = arith.constant 0 : i32
    %c0_i32_0 = arith.constant 0 : i32
    %c0_i32_1 = arith.constant 0 : i32
    return %c0_i32, %c0_i32_0 : i32, i32
  }
  func.func @transform_3(%arg0: i32) -> (i32, i32) {
    %c0_i32 = arith.constant 0 : i32
    %c0_i32_0 = arith.constant 0 : i32
    %c0_i32_1 = arith.constant 0 : i32
    return %c0_i32, %c0_i32_0 : i32, i32
  }
  func.func @transform_4(%arg0: i32) -> (i32, i32) {
    %c0_i32 = arith.constant 0 : i32
    %c0_i32_0 = arith.constant 0 : i32
    return %c0_i32, %arg0 : i32, i32
  }
}

</mosaic_0001>

<llo_original>
// kernel: tpu_custom_call.1
$region0: #{tpu_custom_call.1}
  #allocation0 [shape = 'u32[]', space=smem, size = 0x4, offset = 0x4, fixed_abs, tag = 'smem constant byte address 0x4 - core index']
  #allocation1 [shape = 'u32[144,128]{1,0:T(1,128)}', space=vmem, size = 0x12000, scoped, tag = 'internal scratch']
  %s0 = inlined_call_operand.vmem [shape: f32[8,32], index: 0, kind: input, shape index: {}]
  %s1 = inlined_call_operand.vmem [shape: bf16[160,32], index: 1, kind: input, shape index: {}]
  %s2 = inlined_call_operand.vmem [shape: bf16[32,8], index: 2, kind: input, shape index: {}]
  %s3 = inlined_call_operand.vmem [shape: f32[16,32], index: 3, kind: input, shape index: {}]
  %s4 = inlined_call_operand.hbm [shape: f32[8,8], index: 4, kind: output, shape index: {}]
  %s5 = sld [smem:[#allocation0]]
  $region26: #{tpu_custom_call.1} parent=0
    _
  %s7 = ssub.s32 1, %s5
  %s8 = scalar_select 0, %s7, %s5
  $region1: #{tpu_custom_call.1} parent=0
    #allocation2 [shape = 'u8[4096]{0}', space=vmem, size = 0x1000, scoped, tag = 'output window, operand 0, single buffered']
    #allocation3 [shape = 's32[1]{0}', space=sflag, size = 0x4, scoped, tag = 'scoped memory for tpu_custom_call.1']
    %9 = vsyncpa [#allocation3], 0
    // Predicated region
    $region2: #{tpu_custom_call.1} parent=1 // pred_check
      _
    $region3: #{tpu_custom_call.1} parent=1 // pred_check_branch
      %11 = sbr.rel (0) target = $region5
    $region4: #{tpu_custom_call.1} parent=1 // pred_region
      _
    $region5: #{tpu_custom_call.1} parent=1 // pred_fallthru
      _
    // Predicated region
    $region6: #{tpu_custom_call.1} parent=1 // pred_check
      _
    $region7: #{tpu_custom_call.1} parent=1 // pred_check_branch
      %13 = sbr.rel (0) target = $region9
    $region8: #{tpu_custom_call.1} parent=1 // pred_region
      _
    $region9: #{tpu_custom_call.1} parent=1 // pred_fallthru
      _
    // Predicated region
    $region10: #{tpu_custom_call.1} parent=1 // pred_check
      _
    $region11: #{tpu_custom_call.1} parent=1 // pred_check_branch
      %15 = sbr.rel (0) target = $region13
    $region12: #{tpu_custom_call.1} parent=1 // pred_region
      _
    $region13: #{tpu_custom_call.1} parent=1 // pred_fallthru
      _
    // Predicated region
    $region14: #{tpu_custom_call.1} parent=1 // pred_check
      _
    $region15: #{tpu_custom_call.1} parent=1 // pred_check_branch
      %17 = sbr.rel (0) target = $region17
    $region16: #{tpu_custom_call.1} parent=1 // pred_region
      _
    $region17: #{tpu_custom_call.1} parent=1 // pred_fallthru
      _
    %v19 = vld [vmem:[%s0] sm:$0xff]
    %v20 = vpack.c.bf16 %v19, %v19
    %v21 = vld [vmem:[%s1] sm:$0xf]
    %v22 = vld [vmem:[%s1 + $0x4] sm:$0xf]
    %v23 = vld [vmem:[%s1 + $0x8] sm:$0xf]
    %v24 = vld [vmem:[%s1 + $0xc] sm:$0xf]
    %v25 = vld [vmem:[%s3] sm:$0x1]
    %v26 = vlaneseq
    %v27 = vshrl.u32 %v26, 7
    %v28 = vsub.s32 0, %v27
    %v29 = vrot.slane %v25, %v28
    %v34 = vunpack.c.l.b16 %v21
    %v35 = vunpack.c.l.b16 %v22
    %v36 = vunpack.c.l.b16 %v23
    %v37 = vunpack.c.l.b16 %v24
    %v38 = vpack.c.b16 %v35, %v34
    %v39 = vpack.c.b16 %v37, %v36
    %vm42 = vcmask 261120
    %v44 = vsel %vm42, %v20, 0
    %46 = vmatprep.subr.bf16.mxu0 0
    %47 = vmatpush1.bf16.msra.mxu0 0
    %48 = vmatprep.subr.bf16.mxu0 0
    %49 = vmatpush1.bf16.msra.mxu0 0
    %50 = vmatprep.subr.bf16.mxu0 0
    %51 = vmatpush1.bf16.msra.mxu0 0
    %52 = vmatprep.subr.bf16.mxu0 0
    %53 = vmatpush1.bf16.msra.mxu0 0
    %54 = vmatprep.subr.bf16.mxu0 0
    %55 = vmatpush1.bf16.msra.mxu0 0
    %56 = vmatprep.subr.bf16.mxu0 0
    %57 = vmatpush1.bf16.msra.mxu0 0
    %58 = vmatprep.subr.bf16.mxu0 0
    %59 = vmatpush1.bf16.msra.mxu0 %v39
    %60 = vmatprep.subr.bf16.mxu0 0
    %61 = vmatpush1.bf16.msra.mxu0 %v38
    %62 = vmatprep.subr.bf16.mxu0 0
    %63 = vmatpush2.bf16.msra.mxu0 0
    %64 = vmatprep.subr.bf16.mxu0 0
    %65 = vmatpush2.bf16.msra.mxu0 0
    %66 = vmatprep.subr.bf16.mxu0 0
    %67 = vmatpush2.bf16.msra.mxu0 0
    %68 = vmatprep.subr.bf16.mxu0 0
    %69 = vmatpush2.bf16.msra.mxu0 0
    %70 = vmatprep.subr.bf16.mxu0 0
    %71 = vmatpush2.bf16.msra.mxu0 0
    %72 = vmatprep.subr.bf16.mxu0 0
    %73 = vmatpush2.bf16.msra.mxu0 0
    %74 = vmatprep.subr.bf16.mxu0 0
    %75 = vmatpush2.bf16.msra.mxu0 0
    %76 = vmatprep.subr.bf16.mxu0 0
    %77 = vmatpush2.bf16.msra.mxu0 0
    %78 = vmatprep.mubr.bf16.mxu0 0
    %79 = vmatmul.mubr.bf16.gmra.mxu0 %v44
    %v80 = vpop.f32.mrf.mxu0
    %v81 = vadd.f32 %v29, %v80
    %v82 = vpop.f32.mrf.mxu0
    %v83 = vpop.f32.mrf.mxu0
    %v84 = vpop.f32.mrf.mxu0
    %85 = vdwg.mxu0
    %v86 = vsel %vm42, %v81, 0.0
    %87 = vadd.xlane.f32.xlu0 %v86
    %v88 = vpop.xlane.xlu0 %87
    %v89 = vmul.f32 %v81, %v81
    %v90 = vsel %vm42, %v89, 0.0
    %91 = vadd.xlane.f32.xlu0 %v90
    %v92 = vpop.xlane.xlu0 %91
    %v93 = vmul.f32 %v88, 0.03125
    %v94 = vmul.f32 %v92, 0.03125
    %v95 = vmul.f32 %v93, %v93
    %v96 = vsub.f32 %v94, %v95
    %v97 = vmax.f32 %v96, 0.0
    %v98 = vld [vmem:[%s3 + $0x5] sm:$0x1]
    %v99 = vld [vmem:[%s3 + $0xa] sm:$0x1]
    %v100 = vadd.f32 %v97, 1e-05
    %v101 = vrsqrt.pop %v100
    %v102 = vlaneseq
    %v103 = vshrl.u32 %v102, 7
    %v104 = vsub.s32 0, %v103
    %v105 = vrot.slane %v98, %v104
    %v106 = vmul.f32 %v105, %v101
    %v107 = vsub.f32 %v81, %v93
    %v108 = vmul.f32 %v107, %v106
    %v109 = vlaneseq
    %v110 = vshrl.u32 %v109, 7
    %v111 = vsub.s32 0, %v110
    %v112 = vrot.slane %v99, %v111
    %v113 = vadd.f32 %v108, %v112
    %v114 = vmax.f32 %v113, 0.0
    %v115 = vld [vmem:[%s1 + $0x10] sm:$0xf]
    %v116 = vld [vmem:[%s1 + $0x14] sm:$0xf]
    %v117 = vld [vmem:[%s1 + $0x18] sm:$0xf]
    %v118 = vld [vmem:[%s1 + $0x1c] sm:$0xf]
    %v119 = vpack.c.bf16 %v114, %v114
    %v120 = vld [vmem:[%s3 + $0x1] sm:$0x1]
    %v121 = vlaneseq
    %v122 = vshrl.u32 %v121, 7
    %v123 = vsub.s32 0, %v122
    %v124 = vrot.slane %v120, %v123
    %v129 = vunpack.c.l.b16 %v115
    %v130 = vunpack.c.l.b16 %v116
    %v131 = vunpack.c.l.b16 %v117
    %v132 = vunpack.c.l.b16 %v118
    %v133 = vpack.c.b16 %v130, %v129
    %v134 = vpack.c.b16 %v132, %v131
    %v138 = vsel %vm42, %v119, 0
    %140 = vmatprep.subr.bf16.mxu0 0
    %141 = vmatpush1.bf16.msra.mxu0 0
    %142 = vmatprep.subr.bf16.mxu0 0
    %143 = vmatpush1.bf16.msra.mxu0 0
    %144 = vmatprep.subr.bf16.mxu0 0
    %145 = vmatpush1.bf16.msra.mxu0 0
    %146 = vmatprep.subr.bf16.mxu0 0
    %147 = vmatpush1.bf16.msra.mxu0 0
    %148 = vmatprep.subr.bf16.mxu0 0
    %149 = vmatpush1.bf16.msra.mxu0 0
    %150 = vmatprep.subr.bf16.mxu0 0
    %151 = vmatpush1.bf16.msra.mxu0 0
    %152 = vmatprep.subr.bf16.mxu0 0
    %153 = vmatpush1.bf16.msra.mxu0 %v134
    %154 = vmatprep.subr.bf16.mxu0 0
    %155 = vmatpush1.bf16.msra.mxu0 %v133
    %156 = vmatprep.subr.bf16.mxu0 0
    %157 = vmatpush2.bf16.msra.mxu0 0
    %158 = vmatprep.subr.bf16.mxu0 0
    %159 = vmatpush2.bf16.msra.mxu0 0
    %160 = vmatprep.subr.bf16.mxu0 0
    %161 = vmatpush2.bf16.msra.mxu0 0
    %162 = vmatprep.subr.bf16.mxu0 0
    %163 = vmatpush2.bf16.msra.mxu0 0
    %164 = vmatprep.subr.bf16.mxu0 0
    %165 = vmatpush2.bf16.msra.mxu0 0
    %166 = vmatprep.subr.bf16.mxu0 0
    %167 = vmatpush2.bf16.msra.mxu0 0
    %168 = vmatprep.subr.bf16.mxu0 0
    %169 = vmatpush2.bf16.msra.mxu0 0
    %170 = vmatprep.subr.bf16.mxu0 0
    %171 = vmatpush2.bf16.msra.mxu0 0
    %172 = vmatprep.mubr.bf16.mxu0 0
    %173 = vmatmul.mubr.bf16.gmra.mxu0 %v138
    %v174 = vpop.f32.mrf.mxu0
    %v175 = vadd.f32 %v124, %v174
    %v176 = vpop.f32.mrf.mxu0
    %v177 = vpop.f32.mrf.mxu0
    %v178 = vpop.f32.mrf.mxu0
    %179 = vdwg.mxu0
    %v180 = vsel %vm42, %v175, 0.0
    %181 = vadd.xlane.f32.xlu0 %v180
    %v182 = vpop.xlane.xlu0 %181
    %v183 = vmul.f32 %v175, %v175
    %v184 = vsel %vm42, %v183, 0.0
    %185 = vadd.xlane.f32.xlu0 %v184
    %v186 = vpop.xlane.xlu0 %185
    %v187 = vmul.f32 %v182, 0.03125
    %v188 = vmul.f32 %v186, 0.03125
    %v189 = vmul.f32 %v187, %v187
    %v190 = vsub.f32 %v188, %v189
    %v191 = vmax.f32 %v190, 0.0
    %v192 = vld [vmem:[%s3 + $0x6] sm:$0x1]
    %v193 = vld [vmem:[%s3 + $0xb] sm:$0x1]
    %v194 = vadd.f32 %v191, 1e-05
    %v195 = vrsqrt.pop %v194
    %v196 = vlaneseq
    %v197 = vshrl.u32 %v196, 7
    %v198 = vsub.s32 0, %v197
    %v199 = vrot.slane %v192, %v198
    %v200 = vmul.f32 %v199, %v195
    %v201 = vsub.f32 %v175, %v187
    %v202 = vmul.f32 %v201, %v200
    %v203 = vlaneseq
    %v204 = vshrl.u32 %v203, 7
    %v205 = vsub.s32 0, %v204
    %v206 = vrot.slane %v193, %v205
    %v207 = vadd.f32 %v202, %v206
    %v208 = vmax.f32 %v207, 0.0
    %v209 = vld [vmem:[%s1 + $0x20] sm:$0xf]
    %v210 = vld [vmem:[%s1 + $0x24] sm:$0xf]
    %v211 = vld [vmem:[%s1 + $0x28] sm:$0xf]
    %v212 = vld [vmem:[%s1 + $0x2c] sm:$0xf]
    %v213 = vpack.c.bf16 %v208, %v208
    %v214 = vld [vmem:[%s3 + $0x2] sm:$0x1]
    %v215 = vlaneseq
    %v216 = vshrl.u32 %v215, 7
    %v217 = vsub.s32 0, %v216
    %v218 = vrot.slane %v214, %v217
    %v223 = vunpack.c.l.b16 %v209
    %v224 = vunpack.c.l.b16 %v210
    %v225 = vunpack.c.l.b16 %v211
    %v226 = vunpack.c.l.b16 %v212
    %v227 = vpack.c.b16 %v224, %v223
    %v228 = vpack.c.b16 %v226, %v225
    %v232 = vsel %vm42, %v213, 0
    %234 = vmatprep.subr.bf16.mxu0 0
    %235 = vmatpush1.bf16.msra.mxu0 0
    %236 = vmatprep.subr.bf16.mxu0 0
    %237 = vmatpush1.bf16.msra.mxu0 0
    %238 = vmatprep.subr.bf16.mxu0 0
    %239 = vmatpush1.bf16.msra.mxu0 0
    %240 = vmatprep.subr.bf16.mxu0 0
    %241 = vmatpush1.bf16.msra.mxu0 0
    %242 = vmatprep.subr.bf16.mxu0 0
    %243 = vmatpush1.bf16.msra.mxu0 0
    %244 = vmatprep.subr.bf16.mxu0 0
    %245 = vmatpush1.bf16.msra.mxu0 0
    %246 = vmatprep.subr.bf16.mxu0 0
    %247 = vmatpush1.bf16.msra.mxu0 %v228
    %248 = vmatprep.subr.bf16.mxu0 0
    %249 = vmatpush1.bf16.msra.mxu0 %v227
    %250 = vmatprep.subr.bf16.mxu0 0
    %251 = vmatpush2.bf16.msra.mxu0 0
    %252 = vmatprep.subr.bf16.mxu0 0
    %253 = vmatpush2.bf16.msra.mxu0 0
    %254 = vmatprep.subr.bf16.mxu0 0
    %255 = vmatpush2.bf16.msra.mxu0 0
    %256 = vmatprep.subr.bf16.mxu0 0
    %257 = vmatpush2.bf16.msra.mxu0 0
    %258 = vmatprep.subr.bf16.mxu0 0
    %259 = vmatpush2.bf16.msra.mxu0 0
    %260 = vmatprep.subr.bf16.mxu0 0
    %261 = vmatpush2.bf16.msra.mxu0 0
    %262 = vmatprep.subr.bf16.mxu0 0
    %263 = vmatpush2.bf16.msra.mxu0 0
    %264 = vmatprep.subr.bf16.mxu0 0
    %265 = vmatpush2.bf16.msra.mxu0 0
    %266 = vmatprep.mubr.bf16.mxu0 0
    %267 = vmatmul.mubr.bf16.gmra.mxu0 %v232
    %v268 = vpop.f32.mrf.mxu0
    %v269 = vadd.f32 %v218, %v268
    %v270 = vpop.f32.mrf.mxu0
    %v271 = vpop.f32.mrf.mxu0
    %v272 = vpop.f32.mrf.mxu0
    %273 = vdwg.mxu0
    %v274 = vsel %vm42, %v269, 0.0
    %275 = vadd.xlane.f32.xlu0 %v274
    %v276 = vpop.xlane.xlu0 %275
    %v277 = vmul.f32 %v269, %v269
    %v278 = vsel %vm42, %v277, 0.0
    %279 = vadd.xlane.f32.xlu0 %v278
    %v280 = vpop.xlane.xlu0 %279
    %v281 = vmul.f32 %v276, 0.03125
    %v282 = vmul.f32 %v280, 0.03125
    %v283 = vmul.f32 %v281, %v281
    %v284 = vsub.f32 %v282, %v283
    %v285 = vmax.f32 %v284, 0.0
    %v286 = vld [vmem:[%s3 + $0x7] sm:$0x1]
    %v287 = vld [vmem:[%s3 + $0xc] sm:$0x1]
    %v288 = vadd.f32 %v285, 1e-05
    %v289 = vrsqrt.pop %v288
    %v290 = vlaneseq
    %v291 = vshrl.u32 %v290, 7
    %v292 = vsub.s32 0, %v291
    %v293 = vrot.slane %v286, %v292
    %v294 = vmul.f32 %v293, %v289
    %v295 = vsub.f32 %v269, %v281
    %v296 = vmul.f32 %v295, %v294
    %v297 = vlaneseq
    %v298 = vshrl.u32 %v297, 7
    %v299 = vsub.s32 0, %v298
    %v300 = vrot.slane %v287, %v299
    %v301 = vadd.f32 %v296, %v300
    %v302 = vmax.f32 %v301, 0.0
    %v303 = vld [vmem:[%s1 + $0x30] sm:$0xf]
    %v304 = vld [vmem:[%s1 + $0x34] sm:$0xf]
    %v305 = vld [vmem:[%s1 + $0x38] sm:$0xf]
    %v306 = vld [vmem:[%s1 + $0x3c] sm:$0xf]
    %v307 = vpack.c.bf16 %v302, %v302
    %v308 = vld [vmem:[%s3 + $0x3] sm:$0x1]
    %v309 = vlaneseq
    %v310 = vshrl.u32 %v309, 7
    %v311 = vsub.s32 0, %v310
    %v312 = vrot.slane %v308, %v311
    %v317 = vunpack.c.l.b16 %v303
    %v318 = vunpack.c.l.b16 %v304
    %v319 = vunpack.c.l.b16 %v305
    %v320 = vunpack.c.l.b16 %v306
    %v321 = vpack.c.b16 %v318, %v317
    %v322 = vpack.c.b16 %v320, %v319
    %v326 = vsel %vm42, %v307, 0
    %328 = vmatprep.subr.bf16.mxu0 0
    %329 = vmatpush1.bf16.msra.mxu0 0
    %330 = vmatprep.subr.bf16.mxu0 0
    %331 = vmatpush1.bf16.msra.mxu0 0
    %332 = vmatprep.subr.bf16.mxu0 0
    %333 = vmatpush1.bf16.msra.mxu0 0
    %334 = vmatprep.subr.bf16.mxu0 0
    %335 = vmatpush1.bf16.msra.mxu0 0
    %336 = vmatprep.subr.bf16.mxu0 0
    %337 = vmatpush1.bf16.msra.mxu0 0
    %338 = vmatprep.subr.bf16.mxu0 0
    %339 = vmatpush1.bf16.msra.mxu0 0
    %340 = vmatprep.subr.bf16.mxu0 0
    %341 = vmatpush1.bf16.msra.mxu0 %v322
    %342 = vmatprep.subr.bf16.mxu0 0
    %343 = vmatpush1.bf16.msra.mxu0 %v321
    %344 = vmatprep.subr.bf16.mxu0 0
    %345 = vmatpush2.bf16.msra.mxu0 0
    %346 = vmatprep.subr.bf16.mxu0 0
    %347 = vmatpush2.bf16.msra.mxu0 0
    %348 = vmatprep.subr.bf16.mxu0 0
    %349 = vmatpush2.bf16.msra.mxu0 0
    %350 = vmatprep.subr.bf16.mxu0 0
    %351 = vmatpush2.bf16.msra.mxu0 0
    %352 = vmatprep.subr.bf16.mxu0 0
    %353 = vmatpush2.bf16.msra.mxu0 0
    %354 = vmatprep.subr.bf16.mxu0 0
    %355 = vmatpush2.bf16.msra.mxu0 0
    %356 = vmatprep.subr.bf16.mxu0 0
    %357 = vmatpush2.bf16.msra.mxu0 0
    %358 = vmatprep.subr.bf16.mxu0 0
    %359 = vmatpush2.bf16.msra.mxu0 0
    %360 = vmatprep.mubr.bf16.mxu0 0
    %361 = vmatmul.mubr.bf16.gmra.mxu0 %v326
    %v362 = vpop.f32.mrf.mxu0
    %v363 = vadd.f32 %v312, %v362
    %v364 = vpop.f32.mrf.mxu0
    %v365 = vpop.f32.mrf.mxu0
    %v366 = vpop.f32.mrf.mxu0
    %367 = vdwg.mxu0
    %v368 = vsel %vm42, %v363, 0.0
    %369 = vadd.xlane.f32.xlu0 %v368
    %v370 = vpop.xlane.xlu0 %369
    %v371 = vmul.f32 %v363, %v363
    %v372 = vsel %vm42, %v371, 0.0
    %373 = vadd.xlane.f32.xlu0 %v372
    %v374 = vpop.xlane.xlu0 %373
    %v375 = vmul.f32 %v370, 0.03125
    %v376 = vmul.f32 %v374, 0.03125
    %v377 = vmul.f32 %v375, %v375
    %v378 = vsub.f32 %v376, %v377
    %v379 = vmax.f32 %v378, 0.0
    %v380 = vld [vmem:[%s3 + $0x8] sm:$0x1]
    %v381 = vld [vmem:[%s3 + $0xd] sm:$0x1]
    %v382 = vadd.f32 %v379, 1e-05
    %v383 = vrsqrt.pop %v382
    %v384 = vlaneseq
    %v385 = vshrl.u32 %v384, 7
    %v386 = vsub.s32 0, %v385
    %v387 = vrot.slane %v380, %v386
    %v388 = vmul.f32 %v387, %v383
    %v389 = vsub.f32 %v363, %v375
    %v390 = vmul.f32 %v389, %v388
    %v391 = vlaneseq
    %v392 = vshrl.u32 %v391, 7
    %v393 = vsub.s32 0, %v392
    %v394 = vrot.slane %v381, %v393
    %v395 = vadd.f32 %v390, %v394
    %v396 = vmax.f32 %v395, 0.0
    %v397 = vld [vmem:[%s1 + $0x40] sm:$0xf]
    %v398 = vld [vmem:[%s1 + $0x44] sm:$0xf]
    %v399 = vld [vmem:[%s1 + $0x48] sm:$0xf]
    %v400 = vld [vmem:[%s1 + $0x4c] sm:$0xf]
    %v401 = vpack.c.bf16 %v396, %v396
    %v402 = vld [vmem:[%s3 + $0x4] sm:$0x1]
    %v403 = vlaneseq
    %v404 = vshrl.u32 %v403, 7
    %v405 = vsub.s32 0, %v404
    %v406 = vrot.slane %v402, %v405
    %v411 = vunpack.c.l.b16 %v397
    %v412 = vunpack.c.l.b16 %v398
    %v413 = vunpack.c.l.b16 %v399
    %v414 = vunpack.c.l.b16 %v400
    %v415 = vpack.c.b16 %v412, %v411
    %v416 = vpack.c.b16 %v414, %v413
    %v420 = vsel %vm42, %v401, 0
    %422 = vmatprep.subr.bf16.mxu0 0
    %423 = vmatpush1.bf16.msra.mxu0 0
    %424 = vmatprep.subr.bf16.mxu0 0
    %425 = vmatpush1.bf16.msra.mxu0 0
    %426 = vmatprep.subr.bf16.mxu0 0
    %427 = vmatpush1.bf16.msra.mxu0 0
    %428 = vmatprep.subr.bf16.mxu0 0
    %429 = vmatpush1.bf16.msra.mxu0 0
    %430 = vmatprep.subr.bf16.mxu0 0
    %431 = vmatpush1.bf16.msra.mxu0 0
    %432 = vmatprep.subr.bf16.mxu0 0
    %433 = vmatpush1.bf16.msra.mxu0 0
    %434 = vmatprep.subr.bf16.mxu0 0
    %435 = vmatpush1.bf16.msra.mxu0 %v416
    %436 = vmatprep.subr.bf16.mxu0 0
    %437 = vmatpush1.bf16.msra.mxu0 %v415
    %438 = vmatprep.subr.bf16.mxu0 0
    %439 = vmatpush2.bf16.msra.mxu0 0
    %440 = vmatprep.subr.bf16.mxu0 0
    %441 = vmatpush2.bf16.msra.mxu0 0
    %442 = vmatprep.subr.bf16.mxu0 0
    %443 = vmatpush2.bf16.msra.mxu0 0
    %444 = vmatprep.subr.bf16.mxu0 0
    %445 = vmatpush2.bf16.msra.mxu0 0
    %446 = vmatprep.subr.bf16.mxu0 0
    %447 = vmatpush2.bf16.msra.mxu0 0
    %448 = vmatprep.subr.bf16.mxu0 0
    %449 = vmatpush2.bf16.msra.mxu0 0
    %450 = vmatprep.subr.bf16.mxu0 0
    %451 = vmatpush2.bf16.msra.mxu0 0
    %452 = vmatprep.subr.bf16.mxu0 0
    %453 = vmatpush2.bf16.msra.mxu0 0
    %454 = vmatprep.mubr.bf16.mxu0 0
    %455 = vmatmul.mubr.bf16.gmra.mxu0 %v420
    %v456 = vpop.f32.mrf.mxu0
    %v457 = vadd.f32 %v406, %v456
    %v458 = vpop.f32.mrf.mxu0
    %v459 = vpop.f32.mrf.mxu0
    %v460 = vpop.f32.mrf.mxu0
    %461 = vdwg.mxu0
    %v462 = vsel %vm42, %v457, 0.0
    %463 = vadd.xlane.f32.xlu0 %v462
    %v464 = vpop.xlane.xlu0 %463
    %v465 = vmul.f32 %v457, %v457
    %v466 = vsel %vm42, %v465, 0.0
    %467 = vadd.xlane.f32.xlu0 %v466
    %v468 = vpop.xlane.xlu0 %467
    %v469 = vmul.f32 %v464, 0.03125
    %v470 = vmul.f32 %v468, 0.03125
    %v471 = vmul.f32 %v469, %v469
    %v472 = vsub.f32 %v470, %v471
    %v473 = vmax.f32 %v472, 0.0
    %v474 = vld [vmem:[%s3 + $0x9] sm:$0x1]
    %v475 = vld [vmem:[%s3 + $0xe] sm:$0x1]
    %v476 = vadd.f32 %v473, 1e-05
    %v477 = vrsqrt.pop %v476
    %v478 = vlaneseq
    %v479 = vshrl.u32 %v478, 7
    %v480 = vsub.s32 0, %v479
    %v481 = vrot.slane %v474, %v480
    %v482 = vmul.f32 %v481, %v477
    %v483 = vsub.f32 %v457, %v469
    %v484 = vmul.f32 %v483, %v482
    %v485 = vlaneseq
    %v486 = vshrl.u32 %v485, 7
    %v487 = vsub.s32 0, %v486
    %v488 = vrot.slane %v475, %v487
    %v489 = vadd.f32 %v484, %v488
    %v490 = vmax.f32 %v489, 0.0
    %v491 = vpack.c.bf16 %v490, %v490
    %v492 = vld [vmem:[%s2] sm:$0xf]
    %v493 = vld [vmem:[%s2 + $0x4] sm:$0xf]
    %v494 = vld [vmem:[%s2 + $0x8] sm:$0xf]
    %v495 = vld [vmem:[%s2 + $0xc] sm:$0xf]
    %v496 = vld [vmem:[%s3 + $0xf] sm:$0x1]
    %v497 = vlaneseq
    %v498 = vshrl.u32 %v497, 7
    %v499 = vsub.s32 0, %v498
    %v500 = vrot.slane %v496, %v499
    %v505 = vunpack.c.l.b16 %v492
    %v506 = vunpack.c.l.b16 %v493
    %v507 = vunpack.c.l.b16 %v494
    %v508 = vunpack.c.l.b16 %v495
    %v509 = vpack.c.b16 %v506, %v505
    %v510 = vpack.c.b16 %v508, %v507
    %v514 = vsel %vm42, %v491, 0
    %516 = vmatprep.subr.bf16.mxu0 0
    %517 = vmatpush1.bf16.msra.mxu0 0
    %518 = vmatprep.subr.bf16.mxu0 0
    %519 = vmatpush1.bf16.msra.mxu0 0
    %520 = vmatprep.subr.bf16.mxu0 0
    %521 = vmatpush1.bf16.msra.mxu0 0
    %522 = vmatprep.subr.bf16.mxu0 0
    %523 = vmatpush1.bf16.msra.mxu0 0
    %524 = vmatprep.subr.bf16.mxu0 0
    %525 = vmatpush1.bf16.msra.mxu0 0
    %526 = vmatprep.subr.bf16.mxu0 0
    %527 = vmatpush1.bf16.msra.mxu0 0
    %528 = vmatprep.subr.bf16.mxu0 0
    %529 = vmatpush1.bf16.msra.mxu0 %v510
    %530 = vmatprep.subr.bf16.mxu0 0
    %531 = vmatpush1.bf16.msra.mxu0 %v509
    %532 = vmatprep.subr.bf16.mxu0 0
    %533 = vmatpush2.bf16.msra.mxu0 0
    %534 = vmatprep.subr.bf16.mxu0 0
    %535 = vmatpush2.bf16.msra.mxu0 0
    %536 = vmatprep.subr.bf16.mxu0 0
    %537 = vmatpush2.bf16.msra.mxu0 0
    %538 = vmatprep.subr.bf16.mxu0 0
    %539 = vmatpush2.bf16.msra.mxu0 0
    %540 = vmatprep.subr.bf16.mxu0 0
    %541 = vmatpush2.bf16.msra.mxu0 0
    %542 = vmatprep.subr.bf16.mxu0 0
    %543 = vmatpush2.bf16.msra.mxu0 0
    %544 = vmatprep.subr.bf16.mxu0 0
    %545 = vmatpush2.bf16.msra.mxu0 0
    %546 = vmatprep.subr.bf16.mxu0 0
    %547 = vmatpush2.bf16.msra.mxu0 0
    %548 = vmatprep.mubr.bf16.mxu0 0
    %549 = vmatmul.mubr.bf16.gmra.mxu0 %v514
    %v550 = vpop.f32.mrf.mxu0
    %v551 = vadd.f32 %v500, %v550
    %v552 = vpop.f32.mrf.mxu0
    %v553 = vpop.f32.mrf.mxu0
    %v554 = vpop.f32.mrf.mxu0
    %555 = vdwg.mxu0
    %556 = vxpose.xlu0.b32.start [1/16] %v551, 128
    %557 = vxpose.xlu0.b32.cont [2/16] 0.0, 128
    %558 = vxpose.xlu0.b32.cont [3/16] 0.0, 128
    %559 = vxpose.xlu0.b32.cont [4/16] 0.0, 128
    %560 = vxpose.xlu0.b32.cont [5/16] 0.0, 128
    %561 = vxpose.xlu0.b32.cont [6/16] 0.0, 128
    %562 = vxpose.xlu0.b32.cont [7/16] 0.0, 128
    %563 = vxpose.xlu0.b32.cont [8/16] 0.0, 128
    %564 = vxpose.xlu0.b32.cont [9/16] 0.0, 128
    %565 = vxpose.xlu0.b32.cont [10/16] 0.0, 128
    %566 = vxpose.xlu0.b32.cont [11/16] 0.0, 128
    %567 = vxpose.xlu0.b32.cont [12/16] 0.0, 128
    %568 = vxpose.xlu0.b32.cont [13/16] 0.0, 128
    %569 = vxpose.xlu0.b32.cont [14/16] 0.0, 128
    %570 = vxpose.xlu0.b32.cont [15/16] 0.0, 128
    %571 = vxpose.xlu0.b32.end [16/16] 0.0, 128
    %v572 = vpop.trf.xlu0
    %v573 = vpop.trf.xlu0
    %v574 = vpop.trf.xlu0
    %v575 = vpop.trf.xlu0
    %v576 = vpop.trf.xlu0
    %v577 = vpop.trf.xlu0
    %v578 = vpop.trf.xlu0
    %v579 = vpop.trf.xlu0
    %v580 = vpop.trf.xlu0
    %v581 = vpop.trf.xlu0
    %v582 = vpop.trf.xlu0
    %v583 = vpop.trf.xlu0
    %v584 = vpop.trf.xlu0
    %v585 = vpop.trf.xlu0
    %v586 = vpop.trf.xlu0
    %v587 = vpop.trf.xlu0
    %v588 = vtanh.pop %v572
    %vm589 = vcmask 64512
    %590 = vst.msk [vmem:[#allocation2] sm:$0xff] %vm589, %v588
    // Predicated region
    $region18: #{tpu_custom_call.1} parent=1 // pred_check
      _
    $region19: #{tpu_custom_call.1} parent=1 // pred_check_branch
      %592 = sbr.rel (0) target = $region21
    $region20: #{tpu_custom_call.1} parent=1 // pred_region
      %s594 = ssub.s32 128, 128
      %595 = vsyncadd [#allocation3], %s594
      %s597 = sshll.u32 [#allocation2], 4
      %s598 = int_to_ptr.vmem [resolvable:$true] %s597
      %600 = dma.vmem_to_hbm [thread:$0]  %s598, 128, %s4, [#allocation3]
    $region21: #{tpu_custom_call.1} parent=1 // pred_fallthru
      _
    // Predicated region
    $region22: #{tpu_custom_call.1} parent=1 // pred_check
      _
    $region23: #{tpu_custom_call.1} parent=1 // pred_check_branch
      %602 = sbr.rel (0) target = $region25
    $region24: #{tpu_custom_call.1} parent=1 // pred_region
      %603 = dma.done [#allocation3], 128
    $region25: #{tpu_custom_call.1} parent=1 // pred_fallthru
      _
    %604 = vsyncpa [#allocation3], 1

// kernel: tpu_custom_call.1
$region0: #{tpu_custom_call.1}
  #allocation0 [shape = 'u32[]', space=smem, size = 0x4, offset = 0x4, fixed_abs, tag = 'smem constant byte address 0x4 - core index']
  #allocation1 [shape = 'u32[144,128]{1,0:T(1,128)}', space=vmem, size = 0x12000, scoped, tag = 'internal scratch']
  %s0 = inlined_call_operand.vmem [shape: f32[8,32], index: 0, kind: input, shape index: {}]
  %s1 = inlined_call_operand.vmem [shape: bf16[160,32], index: 1, kind: input, shape index: {}]
  %s2 = inlined_call_operand.vmem [shape: bf16[32,8], index: 2, kind: input, shape index: {}]
  %s3 = inlined_call_operand.vmem [shape: f32[16,32], index: 3, kind: input, shape index: {}]
  %s4 = inlined_call_operand.hbm [shape: f32[8,8], index: 4, kind: output, shape index: {}]
  %s5 = sld [smem:[#allocation0]]
  $region26: #{tpu_custom_call.1} parent=0
    _
  %s7 = ssub.s32 1, %s5
  %s8 = scalar_select 0, %s7, %s5
  $region1: #{tpu_custom_call.1} parent=0
    #allocation2 [shape = 'u8[4096]{0}', space=vmem, size = 0x1000, scoped, tag = 'output window, operand 0, single buffered']
    #allocation3 [shape = 's32[1]{0}', space=sflag, size = 0x4, scoped, tag = 'scoped memory for tpu_custom_call.1']
    %9 = vsyncpa [#allocation3], 0
    // Predicated region
    $region2: #{tpu_custom_call.1} parent=1 // pred_check
      _
    $region3: #{tpu_custom_call.1} parent=1 // pred_check_branch
      %11 = sbr.rel (0) target = $region5
    $region4: #{tpu_custom_call.1} parent=1 // pred_region
      _
    $region5: #{tpu_custom_call.1} parent=1 // pred_fallthru
      _
    // Predicated region
    $region6: #{tpu_custom_call.1} parent=1 // pred_check
      _
    $region7: #{tpu_custom_call.1} parent=1 // pred_check_branch
      %13 = sbr.rel (0) target = $region9
    $region8: #{tpu_custom_call.1} parent=1 // pred_region
      _
    $region9: #{tpu_custom_call.1} parent=1 // pred_fallthru
      _
    // Predicated region
    $region10: #{tpu_custom_call.1} parent=1 // pred_check
      _
    $region11: #{tpu_custom_call.1} parent=1 // pred_check_branch
      %15 = sbr.rel (0) target = $region13
    $region12: #{tpu_custom_call.1} parent=1 // pred_region
      _
    $region13: #{tpu_custom_call.1} parent=1 // pred_fallthru
      _
    // Predicated region
    $region14: #{tpu_custom_call.1} parent=1 // pred_check
      _
    $region15: #{tpu_custom_call.1} parent=1 // pred_check_branch
      %17 = sbr.rel (0) target = $region17
    $region16: #{tpu_custom_call.1} parent=1 // pred_region
      _
    $region17: #{tpu_custom_call.1} parent=1 // pred_fallthru
      _
    %v19 = vld [vmem:[%s0] sm:$0xff]
    %v20 = vpack.c.bf16 %v19, %v19
    %v21 = vld [vmem:[%s1] sm:$0xf]
    %v22 = vld [vmem:[%s1 + $0x4] sm:$0xf]
    %v23 = vld [vmem:[%s1 + $0x8] sm:$0xf]
    %v24 = vld [vmem:[%s1 + $0xc] sm:$0xf]
    %v25 = vld [vmem:[%s3] sm:$0x1]
    %v26 = vlaneseq
    %v27 = vshrl.u32 %v26, 7
    %v28 = vsub.s32 0, %v27
    %v29 = vrot.slane %v25, %v28
    %v34 = vunpack.c.l.b16 %v21
    %v35 = vunpack.c.l.b16 %v22
    %v36 = vunpack.c.l.b16 %v23
    %v37 = vunpack.c.l.b16 %v24
    %v38 = vpack.c.b16 %v35, %v34
    %v39 = vpack.c.b16 %v37, %v36
    %vm42 = vcmask 261120
    %v44 = vsel %vm42, %v20, 0
    %46 = vmatprep.subr.bf16.mxu0 0
    %47 = vmatpush1.bf16.msra.mxu0 0
    %48 = vmatprep.subr.bf16.mxu0 0
    %49 = vmatpush1.bf16.msra.mxu0 0
    %50 = vmatprep.subr.bf16.mxu0 0
    %51 = vmatpush1.bf16.msra.mxu0 0
    %52 = vmatprep.subr.bf16.mxu0 0
    %53 = vmatpush1.bf16.msra.mxu0 0
    %54 = vmatprep.subr.bf16.mxu0 0
    %55 = vmatpush1.bf16.msra.mxu0 0
    %56 = vmatprep.subr.bf16.mxu0 0
    %57 = vmatpush1.bf16.msra.mxu0 0
    %58 = vmatprep.subr.bf16.mxu0 0
    %59 = vmatpush1.bf16.msra.mxu0 %v39
    %60 = vmatprep.subr.bf16.mxu0 0
    %61 = vmatpush1.bf16.msra.mxu0 %v38
    %62 = vmatprep.subr.bf16.mxu0 0
    %63 = vmatpush2.bf16.msra.mxu0 0
    %64 = vmatprep.subr.bf16.mxu0 0
    %65 = vmatpush2.bf16.msra.mxu0 0
    %66 = vmatprep.subr.bf16.mxu0 0
    %67 = vmatpush2.bf16.msra.mxu0 0
    %68 = vmatprep.subr.bf16.mxu0 0
    %69 = vmatpush2.bf16.msra.mxu0 0
    %70 = vmatprep.subr.bf16.mxu0 0
    %71 = vmatpush2.bf16.msra.mxu0 0
    %72 = vmatprep.subr.bf16.mxu0 0
    %73 = vmatpush2.bf16.msra.mxu0 0
    %74 = vmatprep.subr.bf16.mxu0 0
    %75 = vmatpush2.bf16.msra.mxu0 0
    %76 = vmatprep.subr.bf16.mxu0 0
    %77 = vmatpush2.bf16.msra.mxu0 0
    %78 = vmatprep.mubr.bf16.mxu0 0
    %79 = vmatmul.mubr.bf16.gmra.mxu0 %v44
    %v80 = vpop.f32.mrf.mxu0
    %v81 = vadd.f32 %v29, %v80
    %v82 = vpop.f32.mrf.mxu0
    %v83 = vpop.f32.mrf.mxu0
    %v84 = vpop.f32.mrf.mxu0
    %85 = vdwg.mxu0
    %v86 = vsel %vm42, %v81, 0.0
    %87 = vadd.xlane.f32.xlu0 %v86
    %v88 = vpop.xlane.xlu0 %87
    %v89 = vmul.f32 %v81, %v81
    %v90 = vsel %vm42, %v89, 0.0
    %91 = vadd.xlane.f32.xlu0 %v90
    %v92 = vpop.xlane.xlu0 %91
    %v93 = vmul.f32 %v88, 0.03125
    %v94 = vmul.f32 %v92, 0.03125
    %v95 = vmul.f32 %v93, %v93
    %v96 = vsub.f32 %v94, %v95
    %v97 = vmax.f32 %v96, 0.0
    %v98 = vld [vmem:[%s3 + $0x5] sm:$0x1]
    %v99 = vld [vmem:[%s3 + $0xa] sm:$0x1]
    %v100 = vadd.f32 %v97, 1e-05
    %v101 = vrsqrt.pop %v100
    %v102 = vlaneseq
    %v103 = vshrl.u32 %v102, 7
    %v104 = vsub.s32 0, %v103
    %v105 = vrot.slane %v98, %v104
    %v106 = vmul.f32 %v105, %v101
    %v107 = vsub.f32 %v81, %v93
    %v108 = vmul.f32 %v107, %v106
    %v109 = vlaneseq
    %v110 = vshrl.u32 %v109, 7
    %v111 = vsub.s32 0, %v110
    %v112 = vrot.slane %v99, %v111
    %v113 = vadd.f32 %v108, %v112
    %v114 = vmax.f32 %v113, 0.0
    %v115 = vld [vmem:[%s1 + $0x10] sm:$0xf]
    %v116 = vld [vmem:[%s1 + $0x14] sm:$0xf]
    %v117 = vld [vmem:[%s1 + $0x18] sm:$0xf]
    %v118 = vld [vmem:[%s1 + $0x1c] sm:$0xf]
    %v119 = vpack.c.bf16 %v114, %v114
    %v120 = vld [vmem:[%s3 + $0x1] sm:$0x1]
    %v121 = vlaneseq
    %v122 = vshrl.u32 %v121, 7
    %v123 = vsub.s32 0, %v122
    %v124 = vrot.slane %v120, %v123
    %v129 = vunpack.c.l.b16 %v115
    %v130 = vunpack.c.l.b16 %v116
    %v131 = vunpack.c.l.b16 %v117
    %v132 = vunpack.c.l.b16 %v118
    %v133 = vpack.c.b16 %v130, %v129
    %v134 = vpack.c.b16 %v132, %v131
    %v138 = vsel %vm42, %v119, 0
    %140 = vmatprep.subr.bf16.mxu0 0
    %141 = vmatpush1.bf16.msra.mxu0 0
    %142 = vmatprep.subr.bf16.mxu0 0
    %143 = vmatpush1.bf16.msra.mxu0 0
    %144 = vmatprep.subr.bf16.mxu0 0
    %145 = vmatpush1.bf16.msra.mxu0 0
    %146 = vmatprep.subr.bf16.mxu0 0
    %147 = vmatpush1.bf16.msra.mxu0 0
    %148 = vmatprep.subr.bf16.mxu0 0
    %149 = vmatpush1.bf16.msra.mxu0 0
    %150 = vmatprep.subr.bf16.mxu0 0
    %151 = vmatpush1.bf16.msra.mxu0 0
    %152 = vmatprep.subr.bf16.mxu0 0
    %153 = vmatpush1.bf16.msra.mxu0 %v134
    %154 = vmatprep.subr.bf16.mxu0 0
    %155 = vmatpush1.bf16.msra.mxu0 %v133
    %156 = vmatprep.subr.bf16.mxu0 0
    %157 = vmatpush2.bf16.msra.mxu0 0
    %158 = vmatprep.subr.bf16.mxu0 0
    %159 = vmatpush2.bf16.msra.mxu0 0
    %160 = vmatprep.subr.bf16.mxu0 0
    %161 = vmatpush2.bf16.msra.mxu0 0
    %162 = vmatprep.subr.bf16.mxu0 0
    %163 = vmatpush2.bf16.msra.mxu0 0
    %164 = vmatprep.subr.bf16.mxu0 0
    %165 = vmatpush2.bf16.msra.mxu0 0
    %166 = vmatprep.subr.bf16.mxu0 0
    %167 = vmatpush2.bf16.msra.mxu0 0
    %168 = vmatprep.subr.bf16.mxu0 0
    %169 = vmatpush2.bf16.msra.mxu0 0
    %170 = vmatprep.subr.bf16.mxu0 0
    %171 = vmatpush2.bf16.msra.mxu0 0
    %172 = vmatprep.mubr.bf16.mxu0 0
    %173 = vmatmul.mubr.bf16.gmra.mxu0 %v138
    %v174 = vpop.f32.mrf.mxu0
    %v175 = vadd.f32 %v124, %v174
    %v176 = vpop.f32.mrf.mxu0
    %v177 = vpop.f32.mrf.mxu0
    %v178 = vpop.f32.mrf.mxu0
    %179 = vdwg.mxu0
    %v180 = vsel %vm42, %v175, 0.0
    %181 = vadd.xlane.f32.xlu0 %v180
    %v182 = vpop.xlane.xlu0 %181
    %v183 = vmul.f32 %v175, %v175
    %v184 = vsel %vm42, %v183, 0.0
    %185 = vadd.xlane.f32.xlu0 %v184
    %v186 = vpop.xlane.xlu0 %185
    %v187 = vmul.f32 %v182, 0.03125
    %v188 = vmul.f32 %v186, 0.03125
    %v189 = vmul.f32 %v187, %v187
    %v190 = vsub.f32 %v188, %v189
    %v191 = vmax.f32 %v190, 0.0
    %v192 = vld [vmem:[%s3 + $0x6] sm:$0x1]
    %v193 = vld [vmem:[%s3 + $0xb] sm:$0x1]
    %v194 = vadd.f32 %v191, 1e-05
    %v195 = vrsqrt.pop %v194
    %v196 = vlaneseq
    %v197 = vshrl.u32 %v196, 7
    %v198 = vsub.s32 0, %v197
    %v199 = vrot.slane %v192, %v198
    %v200 = vmul.f32 %v199, %v195
    %v201 = vsub.f32 %v175, %v187
    %v202 = vmul.f32 %v201, %v200
    %v203 = vlaneseq
    %v204 = vshrl.u32 %v203, 7
    %v205 = vsub.s32 0, %v204
    %v206 = vrot.slane %v193, %v205
    %v207 = vadd.f32 %v202, %v206
    %v208 = vmax.f32 %v207, 0.0
    %v209 = vld [vmem:[%s1 + $0x20] sm:$0xf]
    %v210 = vld [vmem:[%s1 + $0x24] sm:$0xf]
    %v211 = vld [vmem:[%s1 + $0x28] sm:$0xf]
    %v212 = vld [vmem:[%s1 + $0x2c] sm:$0xf]
    %v213 = vpack.c.bf16 %v208, %v208
    %v214 = vld [vmem:[%s3 + $0x2] sm:$0x1]
    %v215 = vlaneseq
    %v216 = vshrl.u32 %v215, 7
    %v217 = vsub.s32 0, %v216
    %v218 = vrot.slane %v214, %v217
    %v223 = vunpack.c.l.b16 %v209
    %v224 = vunpack.c.l.b16 %v210
    %v225 = vunpack.c.l.b16 %v211
    %v226 = vunpack.c.l.b16 %v212
    %v227 = vpack.c.b16 %v224, %v223
    %v228 = vpack.c.b16 %v226, %v225
    %v232 = vsel %vm42, %v213, 0
    %234 = vmatprep.subr.bf16.mxu0 0
    %235 = vmatpush1.bf16.msra.mxu0 0
    %236 = vmatprep.subr.bf16.mxu0 0
    %237 = vmatpush1.bf16.msra.mxu0 0
    %238 = vmatprep.subr.bf16.mxu0 0
    %239 = vmatpush1.bf16.msra.mxu0 0
    %240 = vmatprep.subr.bf16.mxu0 0
    %241 = vmatpush1.bf16.msra.mxu0 0
    %242 = vmatprep.subr.bf16.mxu0 0
    %243 = vmatpush1.bf16.msra.mxu0 0
    %244 = vmatprep.subr.bf16.mxu0 0
    %245 = vmatpush1.bf16.msra.mxu0 0
    %246 = vmatprep.subr.bf16.mxu0 0
    %247 = vmatpush1.bf16.msra.mxu0 %v228
    %248 = vmatprep.subr.bf16.mxu0 0
    %249 = vmatpush1.bf16.msra.mxu0 %v227
    %250 = vmatprep.subr.bf16.mxu0 0
    %251 = vmatpush2.bf16.msra.mxu0 0
    %252 = vmatprep.subr.bf16.mxu0 0
    %253 = vmatpush2.bf16.msra.mxu0 0
    %254 = vmatprep.subr.bf16.mxu0 0
    %255 = vmatpush2.bf16.msra.mxu0 0
    %256 = vmatprep.subr.bf16.mxu0 0
    %257 = vmatpush2.bf16.msra.mxu0 0
    %258 = vmatprep.subr.bf16.mxu0 0
    %259 = vmatpush2.bf16.msra.mxu0 0
    %260 = vmatprep.subr.bf16.mxu0 0
    %261 = vmatpush2.bf16.msra.mxu0 0
    %262 = vmatprep.subr.bf16.mxu0 0
    %263 = vmatpush2.bf16.msra.mxu0 0
    %264 = vmatprep.subr.bf16.mxu0 0
    %265 = vmatpush2.bf16.msra.mxu0 0
    %266 = vmatprep.mubr.bf16.mxu0 0
    %267 = vmatmul.mubr.bf16.gmra.mxu0 %v232
    %v268 = vpop.f32.mrf.mxu0
    %v269 = vadd.f32 %v218, %v268
    %v270 = vpop.f32.mrf.mxu0
    %v271 = vpop.f32.mrf.mxu0
    %v272 = vpop.f32.mrf.mxu0
    %273 = vdwg.mxu0
    %v274 = vsel %vm42, %v269, 0.0
    %275 = vadd.xlane.f32.xlu0 %v274
    %v276 = vpop.xlane.xlu0 %275
    %v277 = vmul.f32 %v269, %v269
    %v278 = vsel %vm42, %v277, 0.0
    %279 = vadd.xlane.f32.xlu0 %v278
    %v280 = vpop.xlane.xlu0 %279
    %v281 = vmul.f32 %v276, 0.03125
    %v282 = vmul.f32 %v280, 0.03125
    %v283 = vmul.f32 %v281, %v281
    %v284 = vsub.f32 %v282, %v283
    %v285 = vmax.f32 %v284, 0.0
    %v286 = vld [vmem:[%s3 + $0x7] sm:$0x1]
    %v287 = vld [vmem:[%s3 + $0xc] sm:$0x1]
    %v288 = vadd.f32 %v285, 1e-05
    %v289 = vrsqrt.pop %v288
    %v290 = vlaneseq
    %v291 = vshrl.u32 %v290, 7
    %v292 = vsub.s32 0, %v291
    %v293 = vrot.slane %v286, %v292
    %v294 = vmul.f32 %v293, %v289
    %v295 = vsub.f32 %v269, %v281
    %v296 = vmul.f32 %v295, %v294
    %v297 = vlaneseq
    %v298 = vshrl.u32 %v297, 7
    %v299 = vsub.s32 0, %v298
    %v300 = vrot.slane %v287, %v299
    %v301 = vadd.f32 %v296, %v300
    %v302 = vmax.f32 %v301, 0.0
    %v303 = vld [vmem:[%s1 + $0x30] sm:$0xf]
    %v304 = vld [vmem:[%s1 + $0x34] sm:$0xf]
    %v305 = vld [vmem:[%s1 + $0x38] sm:$0xf]
    %v306 = vld [vmem:[%s1 + $0x3c] sm:$0xf]
    %v307 = vpack.c.bf16 %v302, %v302
    %v308 = vld [vmem:[%s3 + $0x3] sm:$0x1]
    %v309 = vlaneseq
    %v310 = vshrl.u32 %v309, 7
    %v311 = vsub.s32 0, %v310
    %v312 = vrot.slane %v308, %v311
    %v317 = vunpack.c.l.b16 %v303
    %v318 = vunpack.c.l.b16 %v304
    %v319 = vunpack.c.l.b16 %v305
    %v320 = vunpack.c.l.b16 %v306
    %v321 = vpack.c.b16 %v318, %v317
    %v322 = vpack.c.b16 %v320, %v319
    %v326 = vsel %vm42, %v307, 0
    %328 = vmatprep.subr.bf16.mxu0 0
    %329 = vmatpush1.bf16.msra.mxu0 0
    %330 = vmatprep.subr.bf16.mxu0 0
    %331 = vmatpush1.bf16.msra.mxu0 0
    %332 = vmatprep.subr.bf16.mxu0 0
    %333 = vmatpush1.bf16.msra.mxu0 0
    %334 = vmatprep.subr.bf16.mxu0 0
    %335 = vmatpush1.bf16.msra.mxu0 0
    %336 = vmatprep.subr.bf16.mxu0 0
    %337 = vmatpush1.bf16.msra.mxu0 0
    %338 = vmatprep.subr.bf16.mxu0 0
    %339 = vmatpush1.bf16.msra.mxu0 0
    %340 = vmatprep.subr.bf16.mxu0 0
    %341 = vmatpush1.bf16.msra.mxu0 %v322
    %342 = vmatprep.subr.bf16.mxu0 0
    %343 = vmatpush1.bf16.msra.mxu0 %v321
    %344 = vmatprep.subr.bf16.mxu0 0
    %345 = vmatpush2.bf16.msra.mxu0 0
    %346 = vmatprep.subr.bf16.mxu0 0
    %347 = vmatpush2.bf16.msra.mxu0 0
    %348 = vmatprep.subr.bf16.mxu0 0
    %349 = vmatpush2.bf16.msra.mxu0 0
    %350 = vmatprep.subr.bf16.mxu0 0
    %351 = vmatpush2.bf16.msra.mxu0 0
    %352 = vmatprep.subr.bf16.mxu0 0
    %353 = vmatpush2.bf16.msra.mxu0 0
    %354 = vmatprep.subr.bf16.mxu0 0
    %355 = vmatpush2.bf16.msra.mxu0 0
    %356 = vmatprep.subr.bf16.mxu0 0
    %357 = vmatpush2.bf16.msra.mxu0 0
    %358 = vmatprep.subr.bf16.mxu0 0
    %359 = vmatpush2.bf16.msra.mxu0 0
    %360 = vmatprep.mubr.bf16.mxu0 0
    %361 = vmatmul.mubr.bf16.gmra.mxu0 %v326
    %v362 = vpop.f32.mrf.mxu0
    %v363 = vadd.f32 %v312, %v362
    %v364 = vpop.f32.mrf.mxu0
    %v365 = vpop.f32.mrf.mxu0
    %v366 = vpop.f32.mrf.mxu0
    %367 = vdwg.mxu0
    %v368 = vsel %vm42, %v363, 0.0
    %369 = vadd.xlane.f32.xlu0 %v368
    %v370 = vpop.xlane.xlu0 %369
    %v371 = vmul.f32 %v363, %v363
    %v372 = vsel %vm42, %v371, 0.0
    %373 = vadd.xlane.f32.xlu0 %v372
    %v374 = vpop.xlane.xlu0 %373
    %v375 = vmul.f32 %v370, 0.03125
    %v376 = vmul.f32 %v374, 0.03125
    %v377 = vmul.f32 %v375, %v375
    %v378 = vsub.f32 %v376, %v377
    %v379 = vmax.f32 %v378, 0.0
    %v380 = vld [vmem:[%s3 + $0x8] sm:$0x1]
    %v381 = vld [vmem:[%s3 + $0xd] sm:$0x1]
    %v382 = vadd.f32 %v379, 1e-05
    %v383 = vrsqrt.pop %v382
    %v384 = vlaneseq
    %v385 = vshrl.u32 %v384, 7
    %v386 = vsub.s32 0, %v385
    %v387 = vrot.slane %v380, %v386
    %v388 = vmul.f32 %v387, %v383
    %v389 = vsub.f32 %v363, %v375
    %v390 = vmul.f32 %v389, %v388
    %v391 = vlaneseq
    %v392 = vshrl.u32 %v391, 7
    %v393 = vsub.s32 0, %v392
    %v394 = vrot.slane %v381, %v393
    %v395 = vadd.f32 %v390, %v394
    %v396 = vmax.f32 %v395, 0.0
    %v397 = vld [vmem:[%s1 + $0x40] sm:$0xf]
    %v398 = vld [vmem:[%s1 + $0x44] sm:$0xf]
    %v399 = vld [vmem:[%s1 + $0x48] sm:$0xf]
    %v400 = vld [vmem:[%s1 + $0x4c] sm:$0xf]
    %v401 = vpack.c.bf16 %v396, %v396
    %v402 = vld [vmem:[%s3 + $0x4] sm:$0x1]
    %v403 = vlaneseq
    %v404 = vshrl.u32 %v403, 7
    %v405 = vsub.s32 0, %v404
    %v406 = vrot.slane %v402, %v405
    %v411 = vunpack.c.l.b16 %v397
    %v412 = vunpack.c.l.b16 %v398
    %v413 = vunpack.c.l.b16 %v399
    %v414 = vunpack.c.l.b16 %v400
    %v415 = vpack.c.b16 %v412, %v411
    %v416 = vpack.c.b16 %v414, %v413
    %v420 = vsel %vm42, %v401, 0
    %422 = vmatprep.subr.bf16.mxu0 0
    %423 = vmatpush1.bf16.msra.mxu0 0
    %424 = vmatprep.subr.bf16.mxu0 0
    %425 = vmatpush1.bf16.msra.mxu0 0
    %426 = vmatprep.subr.bf16.mxu0 0
    %427 = vmatpush1.bf16.msra.mxu0 0
    %428 = vmatprep.subr.bf16.mxu0 0
    %429 = vmatpush1.bf16.msra.mxu0 0
    %430 = vmatprep.subr.bf16.mxu0 0
    %431 = vmatpush1.bf16.msra.mxu0 0
    %432 = vmatprep.subr.bf16.mxu0 0
    %433 = vmatpush1.bf16.msra.mxu0 0
    %434 = vmatprep.subr.bf16.mxu0 0
    %435 = vmatpush1.bf16.msra.mxu0 %v416
    %436 = vmatprep.subr.bf16.mxu0 0
    %437 = vmatpush1.bf16.msra.mxu0 %v415
    %438 = vmatprep.subr.bf16.mxu0 0
    %439 = vmatpush2.bf16.msra.mxu0 0
    %440 = vmatprep.subr.bf16.mxu0 0
    %441 = vmatpush2.bf16.msra.mxu0 0
    %442 = vmatprep.subr.bf16.mxu0 0
    %443 = vmatpush2.bf16.msra.mxu0 0
    %444 = vmatprep.subr.bf16.mxu0 0
    %445 = vmatpush2.bf16.msra.mxu0 0
    %446 = vmatprep.subr.bf16.mxu0 0
    %447 = vmatpush2.bf16.msra.mxu0 0
    %448 = vmatprep.subr.bf16.mxu0 0
    %449 = vmatpush2.bf16.msra.mxu0 0
    %450 = vmatprep.subr.bf16.mxu0 0
    %451 = vmatpush2.bf16.msra.mxu0 0
    %452 = vmatprep.subr.bf16.mxu0 0
    %453 = vmatpush2.bf16.msra.mxu0 0
    %454 = vmatprep.mubr.bf16.mxu0 0
    %455 = vmatmul.mubr.bf16.gmra.mxu0 %v420
    %v456 = vpop.f32.mrf.mxu0
    %v457 = vadd.f32 %v406, %v456
    %v458 = vpop.f32.mrf.mxu0
    %v459 = vpop.f32.mrf.mxu0
    %v460 = vpop.f32.mrf.mxu0
    %461 = vdwg.mxu0
    %v462 = vsel %vm42, %v457, 0.0
    %463 = vadd.xlane.f32.xlu0 %v462
    %v464 = vpop.xlane.xlu0 %463
    %v465 = vmul.f32 %v457, %v457
    %v466 = vsel %vm42, %v465, 0.0
    %467 = vadd.xlane.f32.xlu0 %v466
    %v468 = vpop.xlane.xlu0 %467
    %v469 = vmul.f32 %v464, 0.03125
    %v470 = vmul.f32 %v468, 0.03125
    %v471 = vmul.f32 %v469, %v469
    %v472 = vsub.f32 %v470, %v471
    %v473 = vmax.f32 %v472, 0.0
    %v474 = vld [vmem:[%s3 + $0x9] sm:$0x1]
    %v475 = vld [vmem:[%s3 + $0xe] sm:$0x1]
    %v476 = vadd.f32 %v473, 1e-05
    %v477 = vrsqrt.pop %v476
    %v478 = vlaneseq
    %v479 = vshrl.u32 %v478, 7
    %v480 = vsub.s32 0, %v479
    %v481 = vrot.slane %v474, %v480
    %v482 = vmul.f32 %v481, %v477
    %v483 = vsub.f32 %v457, %v469
    %v484 = vmul.f32 %v483, %v482
    %v485 = vlaneseq
    %v486 = vshrl.u32 %v485, 7
    %v487 = vsub.s32 0, %v486
    %v488 = vrot.slane %v475, %v487
    %v489 = vadd.f32 %v484, %v488
    %v490 = vmax.f32 %v489, 0.0
    %v491 = vpack.c.bf16 %v490, %v490
    %v492 = vld [vmem:[%s2] sm:$0xf]
    %v493 = vld [vmem:[%s2 + $0x4] sm:$0xf]
    %v494 = vld [vmem:[%s2 + $0x8] sm:$0xf]
    %v495 = vld [vmem:[%s2 + $0xc] sm:$0xf]
    %v496 = vld [vmem:[%s3 + $0xf] sm:$0x1]
    %v497 = vlaneseq
    %v498 = vshrl.u32 %v497, 7
    %v499 = vsub.s32 0, %v498
    %v500 = vrot.slane %v496, %v499
    %v505 = vunpack.c.l.b16 %v492
    %v506 = vunpack.c.l.b16 %v493
    %v507 = vunpack.c.l.b16 %v494
    %v508 = vunpack.c.l.b16 %v495
    %v509 = vpack.c.b16 %v506, %v505
    %v510 = vpack.c.b16 %v508, %v507
    %v514 = vsel %vm42, %v491, 0
    %516 = vmatprep.subr.bf16.mxu0 0
    %517 = vmatpush1.bf16.msra.mxu0 0
    %518 = vmatprep.subr.bf16.mxu0 0
    %519 = vmatpush1.bf16.msra.mxu0 0
    %520 = vmatprep.subr.bf16.mxu0 0
    %521 = vmatpush1.bf16.msra.mxu0 0
    %522 = vmatprep.subr.bf16.mxu0 0
    %523 = vmatpush1.bf16.msra.mxu0 0
    %524 = vmatprep.subr.bf16.mxu0 0
    %525 = vmatpush1.bf16.msra.mxu0 0
    %526 = vmatprep.subr.bf16.mxu0 0
    %527 = vmatpush1.bf16.msra.mxu0 0
    %528 = vmatprep.subr.bf16.mxu0 0
    %529 = vmatpush1.bf16.msra.mxu0 %v510
    %530 = vmatprep.subr.bf16.mxu0 0
    %531 = vmatpush1.bf16.msra.mxu0 %v509
    %532 = vmatprep.subr.bf16.mxu0 0
    %533 = vmatpush2.bf16.msra.mxu0 0
    %534 = vmatprep.subr.bf16.mxu0 0
    %535 = vmatpush2.bf16.msra.mxu0 0
    %536 = vmatprep.subr.bf16.mxu0 0
    %537 = vmatpush2.bf16.msra.mxu0 0
    %538 = vmatprep.subr.bf16.mxu0 0
    %539 = vmatpush2.bf16.msra.mxu0 0
    %540 = vmatprep.subr.bf16.mxu0 0
    %541 = vmatpush2.bf16.msra.mxu0 0
    %542 = vmatprep.subr.bf16.mxu0 0
    %543 = vmatpush2.bf16.msra.mxu0 0
    %544 = vmatprep.subr.bf16.mxu0 0
    %545 = vmatpush2.bf16.msra.mxu0 0
    %546 = vmatprep.subr.bf16.mxu0 0
    %547 = vmatpush2.bf16.msra.mxu0 0
    %548 = vmatprep.mubr.bf16.mxu0 0
    %549 = vmatmul.mubr.bf16.gmra.mxu0 %v514
    %v550 = vpop.f32.mrf.mxu0
    %v551 = vadd.f32 %v500, %v550
    %v552 = vpop.f32.mrf.mxu0
    %v553 = vpop.f32.mrf.mxu0
    %v554 = vpop.f32.mrf.mxu0
    %555 = vdwg.mxu0
    %556 = vxpose.xlu0.b32.start [1/16] %v551, 128
    %557 = vxpose.xlu0.b32.cont [2/16] 0.0, 128
    %558 = vxpose.xlu0.b32.cont [3/16] 0.0, 128
    %559 = vxpose.xlu0.b32.cont [4/16] 0.0, 128
    %560 = vxpose.xlu0.b32.cont [5/16] 0.0, 128
    %561 = vxpose.xlu0.b32.cont [6/16] 0.0, 128
    %562 = vxpose.xlu0.b32.cont [7/16] 0.0, 128
    %563 = vxpose.xlu0.b32.cont [8/16] 0.0, 128
    %564 = vxpose.xlu0.b32.cont [9/16] 0.0, 128
    %565 = vxpose.xlu0.b32.cont [10/16] 0.0, 128
    %566 = vxpose.xlu0.b32.cont [11/16] 0.0, 128
    %567 = vxpose.xlu0.b32.cont [12/16] 0.0, 128
    %568 = vxpose.xlu0.b32.cont [13/16] 0.0, 128
    %569 = vxpose.xlu0.b32.cont [14/16] 0.0, 128
    %570 = vxpose.xlu0.b32.cont [15/16] 0.0, 128
    %571 = vxpose.xlu0.b32.end [16/16] 0.0, 128
    %v572 = vpop.trf.xlu0
    %v573 = vpop.trf.xlu0
    %v574 = vpop.trf.xlu0
    %v575 = vpop.trf.xlu0
    %v576 = vpop.trf.xlu0
    %v577 = vpop.trf.xlu0
    %v578 = vpop.trf.xlu0
    %v579 = vpop.trf.xlu0
    %v580 = vpop.trf.xlu0
    %v581 = vpop.trf.xlu0
    %v582 = vpop.trf.xlu0
    %v583 = vpop.trf.xlu0
    %v584 = vpop.trf.xlu0
    %v585 = vpop.trf.xlu0
    %v586 = vpop.trf.xlu0
    %v587 = vpop.trf.xlu0
    %v588 = vtanh.pop %v572
    %vm589 = vcmask 64512
    %590 = vst.msk [vmem:[#allocation2] sm:$0xff] %vm589, %v588
    // Predicated region
    $region18: #{tpu_custom_call.1} parent=1 // pred_check
      _
    $region19: #{tpu_custom_call.1} parent=1 // pred_check_branch
      %592 = sbr.rel (0) target = $region21
    $region20: #{tpu_custom_call.1} parent=1 // pred_region
      %s594 = ssub.s32 128, 128
      %595 = vsyncadd [#allocation3], %s594
      %s597 = sshll.u32 [#allocation2], 4
      %s598 = int_to_ptr.vmem [resolvable:$true] %s597
      %600 = dma.vmem_to_hbm [thread:$0]  %s598, 128, %s4, [#allocation3]
    $region21: #{tpu_custom_call.1} parent=1 // pred_fallthru
      _
    // Predicated region
    $region22: #{tpu_custom_call.1} parent=1 // pred_check
      _
    $region23: #{tpu_custom_call.1} parent=1 // pred_check_branch
      %602 = sbr.rel (0) target = $region25
    $region24: #{tpu_custom_call.1} parent=1 // pred_region
      %603 = dma.done [#allocation3], 128
    $region25: #{tpu_custom_call.1} parent=1 // pred_fallthru
      _
    %604 = vsyncpa [#allocation3], 1

</llo_original>
